<compile_context>
chip_gen: v6e
topology: v6e:2x2x1
jax: 0.10.0
libtpu: 0.0.40
codegen_flags: <defaults>
</compile_context>

<pallas_src>
import functools

import numpy as np
import jax
import jax.numpy as jnp
from jax.experimental import pallas as pl
from jax.experimental.pallas import tpu as pltpu


def _round_up(x, m):
    return -(-x // m) * m


def _build_tap_masks_host(H, W, imgs_per_block):
    """(9, imgs_per_block*H*W) f32 0/1 validity mask per 3x3 tap ((dy,dx) row-major).

    Built host-side with numpy (compile-time constants): no in-kernel
    iota / div / mod / compare work.
    """
    M = H * W
    idx = np.arange(M)
    row, col = idx // W, idx % W
    masks = np.empty((9, M), np.float32)
    for dy in range(3):
        for dx in range(3):
            ok = np.ones(M, np.bool_)
            if dy == 0:
                ok &= row >= 1
            elif dy == 2:
                ok &= row <= H - 2
            if dx == 0:
                ok &= col >= 1
            elif dx == 2:
                ok &= col <= W - 2
            masks[dy * 3 + dx] = ok.astype(np.float32)
    return jnp.asarray(np.tile(masks, (1, imgs_per_block)))


def _conv3x3_lanes(x, w_dy_ref, b_ref, masks, *, W, apply_relu):
    """3x3 'same' conv on a (Cin, L) channels-major lane slab (L = imgs*H*W).

    x:        (Cin, L) f32
    w_dy_ref: Ref (3, Cout, 3*Cin)  -- per-dy folded weights, columns (dx, cin)
    b_ref:    Ref (Cout, 1)
    masks:    (9, L) f32 0/1 tap-validity masks
    Returns (Cout, L) f32.

    Accumulates per-dy (three K = 3*Cin matmuls) so no (9*Cin, L) im2col slab
    is ever materialized. The 1-px halo is handled by circular lane shifts
    (aligned doubled buffer + static slices) plus the border masks — no padded
    activation copy ever exists.
    """
    L = x.shape[-1]
    xx = jnp.concatenate([x, x], axis=-1)        # (Cin, 2L); concat offset L is lane-aligned
    acc = None
    for dy in range(3):
        taps = []
        for dx in range(3):
            t = dy * 3 + dx
            s = (dy - 1) * W + (dx - 1)          # tap shift in flattened lanes
            k = s % L
            v = x if k == 0 else xx[:, k:k + L]  # v[:, p] == x[:, (p + s) mod L]
            if s != 0:
                v = v * masks[t:t + 1, :]        # zero out-of-image taps (incl. wrap)
            taps.append(v)
        patch = jnp.concatenate(taps, axis=0)    # (3*Cin, L)
        part = jnp.dot(w_dy_ref[dy], patch, preferred_element_type=jnp.float32)
        acc = part if acc is None else acc + part
    acc = acc + b_ref[...]                       # (Cout, 1) lane-broadcast
    if apply_relu:
        acc = jnp.maximum(acc, 0.0)
    return acc


def _fused_two_conv_kernel(x_ref, w1_ref, b1_ref, w2_ref, b2_ref, mask_ref,
                           o_ref, *, W):
    """conv3x3 -> bias -> ReLU -> conv3x3 -> bias, fully fused; hidden stays in VMEM."""
    masks = mask_ref[...]
    x = x_ref[...].astype(jnp.float32)
    h = _conv3x3_lanes(x, w1_ref, b1_ref, masks, W=W, apply_relu=True)
    y = _conv3x3_lanes(h, w2_ref, b2_ref, masks, W=W, apply_relu=False)
    o_ref[...] = y.astype(o_ref.dtype)


def _fold_w_per_dy(w):
    """(3, 3, Cin, Cout) -> (3, Cout, 3*Cin); per-dy columns ordered (dx, cin)."""
    kh, kw, cin, cout = w.shape
    return jnp.transpose(w, (0, 3, 1, 2)).reshape(kh, cout, kw * cin)


def fused_conv_relu_conv(x_nchw, w1, b1, w2, b2):
    """conv3x3(same)+bias+ReLU then conv3x3(same)+bias, in ONE pallas_call.

    Input/output are NCHW; one tiny host-side transpose folds the batch into
    the lane axis. The grid splits the lane slab at image boundaries so both
    v7x TensorCores get work.
    """
    N, Cin, H, W = x_nchw.shape
    M = H * W
    C1 = w1.shape[-1]
    C2 = w2.shape[-1]
    assert C1 % 8 == 0, "hidden channel count must be a multiple of 8"

    cin_p = _round_up(Cin, 8)
    c2_p = _round_up(C2, 8)   # pad narrow (e.g. 4-ch decoder) outputs to a full sublane tile

    # NCHW -> (C, N*H*W)
    x_cl = jnp.transpose(x_nchw, (1, 0, 2, 3)).reshape(Cin, N * M)
    if cin_p != Cin:
        x_cl = jnp.pad(x_cl, ((0, cin_p - Cin), (0, 0)))
        w1 = jnp.pad(w1, ((0, 0), (0, 0), (0, cin_p - Cin), (0, 0)))
    if c2_p != C2:
        w2 = jnp.pad(w2, ((0, 0), (0, 0), (0, 0), (0, c2_p - C2)))
        b2 = jnp.pad(b2, ((0, c2_p - C2),))

    w1f = _fold_w_per_dy(w1)          # (3, C1, 3*cin_p)
    w2f = _fold_w_per_dy(w2)          # (3, c2_p, 3*C1)
    b1c = b1.reshape(C1, 1)
    b2c = b2.reshape(c2_p, 1)

    # Split the folded lane slab at image boundaries: 2 blocks when possible
    # (one per v7x TensorCore); otherwise a single full-slab block.
    n_blocks = 2 if (N % 2 == 0 and ((N // 2) * M) % 128 == 0) else 1
    Lb = (N // n_blocks) * M
    masks = _build_tap_masks_host(H, W, N // n_blocks)   # (9, Lb)

    flops = 2 * (C1 * 9 * cin_p + c2_p * 9 * C1) * N * M
    bytes_accessed = 4 * (x_cl.size + c2_p * N * M + w1f.size + w2f.size
                          + b1c.size + b2c.size + masks.size)

    kern = functools.partial(_fused_two_conv_kernel, W=W)
    # TODO(synk): at real VAE resolutions (512^2, hidden>=128) add a row-strip
    # grid axis with explicit 1-row halos (overlapping blocks / manual DMA),
    # feed the MXU bf16 on v6e/v7x, and set vmem_limit_bytes for v7x's 64 MiB.
    out = pl.pallas_call(
        kern,
        out_shape=jax.ShapeDtypeStruct((c2_p, N * M), x_nchw.dtype),
        grid_spec=pltpu.PrefetchScalarGridSpec(
            num_scalar_prefetch=0,
            grid=(n_blocks,),
            in_specs=[
                pl.BlockSpec((cin_p, Lb), lambda i: (0, i)),
                pl.BlockSpec((3, C1, 3 * cin_p), lambda i: (0, 0, 0)),
                pl.BlockSpec((C1, 1), lambda i: (0, 0)),
                pl.BlockSpec((3, c2_p, 3 * C1), lambda i: (0, 0, 0)),
                pl.BlockSpec((c2_p, 1), lambda i: (0, 0)),
                pl.BlockSpec((9, Lb), lambda i: (0, 0)),
            ],
            out_specs=pl.BlockSpec((c2_p, Lb), lambda i: (0, i)),
        ),
        compiler_params=pltpu.CompilerParams(
            dimension_semantics=("parallel",)),
        cost_estimate=pl.CostEstimate(
            flops=flops, transcendentals=0, bytes_accessed=bytes_accessed),
    )(x_cl, w1f, b1c, w2f, b2c, masks)

    out_nchw = jnp.transpose(out.reshape(c2_p, N, H, W), (1, 0, 2, 3))
    return out_nchw[:, :C2]


class SmallVAE:
    """Tiny synthetic VAE; encode/decode hot paths run as fused Pallas kernels."""

    def __init__(self, key, img_ch=4, hidden=32, latent=4):
        ks = jax.random.split(key, 8)
        s = 0.1
        self.enc_w1 = s * jax.random.normal(ks[0], (3, 3, img_ch, hidden), jnp.float32)
        self.enc_b1 = s * jax.random.normal(ks[1], (hidden,), jnp.float32)
        self.enc_w2 = s * jax.random.normal(ks[2], (3, 3, hidden, 2 * latent), jnp.float32)
        self.enc_b2 = s * jax.random.normal(ks[3], (2 * latent,), jnp.float32)
        self.dec_w1 = s * jax.random.normal(ks[4], (3, 3, latent, hidden), jnp.float32)
        self.dec_b1 = s * jax.random.normal(ks[5], (hidden,), jnp.float32)
        self.dec_w2 = s * jax.random.normal(ks[6], (3, 3, hidden, img_ch), jnp.float32)
        self.dec_b2 = s * jax.random.normal(ks[7], (img_ch,), jnp.float32)
        self.latent = latent

    def encode(self, x_nchw):
        moments = fused_conv_relu_conv(x_nchw, self.enc_w1, self.enc_b1,
                                       self.enc_w2, self.enc_b2)
        mu = moments[:, :self.latent]
        logvar = moments[:, self.latent:]
        return mu, logvar

    def decode(self, z_nchw):
        return fused_conv_relu_conv(z_nchw, self.dec_w1, self.dec_b1,
                                    self.dec_w2, self.dec_b2)


class VAEWrapper:
    """JAX/Pallas equivalent of the PyTorch VAEWrapper (forward pass only)."""

    def __init__(self, vae_model, is_encoder=False):
        self.vae = vae_model
        self.is_encoder = is_encoder

    def __call__(self, x_nchw):
        if self.is_encoder:
            return self.vae.encode(x_nchw)
        return self.vae.decode(x_nchw)


# ---- pure-JAX reference (correctness check only) ----
def _conv_ref(x_nchw, w, b):
    y = jax.lax.conv_general_dilated(
        x_nchw, w, window_strides=(1, 1), padding="SAME",
        dimension_numbers=("NCHW", "HWIO", "NCHW"),
        precision=jax.lax.Precision.HIGHEST)
    return y + b.reshape(1, -1, 1, 1)


def _path_ref(x, w1, b1, w2, b2):
    h = jnp.maximum(_conv_ref(x, w1, b1), 0.0)
    return _conv_ref(h, w2, b2)


if __name__ == "__main__":
    key = jax.random.PRNGKey(0)
    k_vae, k_x = jax.random.split(key)

    vae = SmallVAE(k_vae, img_ch=4, hidden=32, latent=4)

    # NCHW inputs, as the PyTorch wrapper expects.
    x = jax.random.normal(k_x, (2, 4, 16, 16), jnp.float32)

    # Default PyTorch wrapper config: is_encoder=False -> decode path.
    decoder = VAEWrapper(vae, is_encoder=False)
    img = decoder(x)
    jax.block_until_ready(img)
    assert img.shape == (2, 4, 16, 16)

    # Encoder branch.
    encoder = VAEWrapper(vae, is_encoder=True)
    mu, logvar = encoder(x)
    jax.block_until_ready((mu, logvar))
    assert mu.shape == (2, 4, 16, 16) and logvar.shape == (2, 4, 16, 16)

    # Numerical check vs. XLA conv reference.
    img_ref = _path_ref(x, vae.dec_w1, vae.dec_b1, vae.dec_w2, vae.dec_b2)
    mom_ref = _path_ref(x, vae.enc_w1, vae.enc_b1, vae.enc_w2, vae.enc_b2)
    assert jnp.allclose(img, img_ref, atol=2e-3, rtol=2e-3)
    assert jnp.allclose(mu, mom_ref[:, :vae.latent], atol=2e-3, rtol=2e-3)
    assert jnp.allclose(logvar, mom_ref[:, vae.latent:], atol=2e-3, rtol=2e-3)

    print("KERNEL_OK")
</pallas_src>

<mosaic_0001>
module attributes {stable_mosaic.version = 11 : i64} {
  func.func @_fused_two_conv_kernel(%arg0: i32, %arg1: memref<8x256xf32, #tpu.memory_space<vmem>>, %arg2: memref<3x32x24xf32, #tpu.memory_space<vmem>>, %arg3: memref<32x1xf32, #tpu.memory_space<vmem>>, %arg4: memref<3x8x96xf32, #tpu.memory_space<vmem>>, %arg5: memref<8x1xf32, #tpu.memory_space<vmem>>, %arg6: memref<9x256xf32, #tpu.memory_space<vmem>>, %arg7: memref<8x256xf32, #tpu.memory_space<vmem>>) attributes {dimension_semantics = [#tpu.dimension_semantics<parallel>], iteration_bounds = array<i64: 2>, scalar_prefetch = 0 : i64, scratch_operands = 0 : i64, tpu.core_type = #tpu.core_type<tc>, window_params = [{transform_indices = @transform_0, window_bounds = array<i64: 8, 256>}, {pipeline_mode = #tpu.pipeline_mode<synchronous>, transform_indices = @transform_1, window_bounds = array<i64: 3, 32, 24>}, {pipeline_mode = #tpu.pipeline_mode<synchronous>, transform_indices = @transform_2, window_bounds = array<i64: 32, 1>}, {pipeline_mode = #tpu.pipeline_mode<synchronous>, transform_indices = @transform_3, window_bounds = array<i64: 3, 8, 96>}, {pipeline_mode = #tpu.pipeline_mode<synchronous>, transform_indices = @transform_4, window_bounds = array<i64: 8, 1>}, {pipeline_mode = #tpu.pipeline_mode<synchronous>, transform_indices = @transform_5, window_bounds = array<i64: 9, 256>}, {transform_indices = @transform_6, window_bounds = array<i64: 8, 256>}]} {
    %c0 = arith.constant 0 : index
    %c0_0 = arith.constant 0 : index
    %0 = vector.load %arg6[%c0, %c0_0] : memref<9x256xf32, #tpu.memory_space<vmem>>, vector<9x256xf32>
    %c0_1 = arith.constant 0 : index
    %c0_2 = arith.constant 0 : index
    %1 = vector.load %arg1[%c0_1, %c0_2] : memref<8x256xf32, #tpu.memory_space<vmem>>, vector<8x256xf32>
    %2 = tpu.concatenate %1, %1 in 1 : vector<8x256xf32>, vector<8x256xf32> -> vector<8x512xf32>
    %3 = vector.extract_strided_slice %2 {offsets = [0, 239], sizes = [8, 256], strides = [1, 1]} : vector<8x512xf32> to vector<8x256xf32>
    %4 = vector.extract_strided_slice %0 {offsets = [0, 0], sizes = [1, 256], strides = [1, 1]} : vector<9x256xf32> to vector<1x256xf32>
    %5 = vector.broadcast %4 : vector<1x256xf32> to vector<8x256xf32>
    %6 = arith.mulf %3, %5 : vector<8x256xf32>
    %7 = vector.extract_strided_slice %2 {offsets = [0, 240], sizes = [8, 256], strides = [1, 1]} : vector<8x512xf32> to vector<8x256xf32>
    %8 = vector.extract_strided_slice %0 {offsets = [1, 0], sizes = [1, 256], strides = [1, 1]} : vector<9x256xf32> to vector<1x256xf32>
    %9 = vector.broadcast %8 : vector<1x256xf32> to vector<8x256xf32>
    %10 = arith.mulf %7, %9 : vector<8x256xf32>
    %11 = vector.extract_strided_slice %2 {offsets = [0, 241], sizes = [8, 256], strides = [1, 1]} : vector<8x512xf32> to vector<8x256xf32>
    %12 = vector.extract_strided_slice %0 {offsets = [2, 0], sizes = [1, 256], strides = [1, 1]} : vector<9x256xf32> to vector<1x256xf32>
    %13 = vector.broadcast %12 : vector<1x256xf32> to vector<8x256xf32>
    %14 = arith.mulf %11, %13 : vector<8x256xf32>
    %15 = tpu.concatenate %6, %10, %14 in 0 : vector<8x256xf32>, vector<8x256xf32>, vector<8x256xf32> -> vector<24x256xf32>
    %c0_3 = arith.constant 0 : index
    %c0_4 = arith.constant 0 : index
    %c0_5 = arith.constant 0 : index
    %16 = vector.load %arg2[%c0_3, %c0_4, %c0_5] : memref<3x32x24xf32, #tpu.memory_space<vmem>>, vector<1x32x24xf32>
    %17 = vector.shape_cast %16 : vector<1x32x24xf32> to vector<32x24xf32>
    %cst = arith.constant dense<0.000000e+00> : vector<32x256xf32>
    %18 = tpu.matmul %17, %15, %cst {dimension_numbers = #tpu.dot_dimension_numbers<[1], [0], [0], [1], [0, 0, 1, 1], [], []>} : vector<32x24xf32>, vector<24x256xf32>, vector<32x256xf32> -> vector<32x256xf32>
    %19 = vector.extract_strided_slice %2 {offsets = [0, 255], sizes = [8, 256], strides = [1, 1]} : vector<8x512xf32> to vector<8x256xf32>
    %20 = vector.extract_strided_slice %0 {offsets = [3, 0], sizes = [1, 256], strides = [1, 1]} : vector<9x256xf32> to vector<1x256xf32>
    %21 = vector.broadcast %20 : vector<1x256xf32> to vector<8x256xf32>
    %22 = arith.mulf %19, %21 : vector<8x256xf32>
    %23 = vector.extract_strided_slice %2 {offsets = [0, 1], sizes = [8, 256], strides = [1, 1]} : vector<8x512xf32> to vector<8x256xf32>
    %24 = vector.extract_strided_slice %0 {offsets = [5, 0], sizes = [1, 256], strides = [1, 1]} : vector<9x256xf32> to vector<1x256xf32>
    %25 = vector.broadcast %24 : vector<1x256xf32> to vector<8x256xf32>
    %26 = arith.mulf %23, %25 : vector<8x256xf32>
    %27 = tpu.concatenate %22, %1, %26 in 0 : vector<8x256xf32>, vector<8x256xf32>, vector<8x256xf32> -> vector<24x256xf32>
    %c1 = arith.constant 1 : index
    %c0_6 = arith.constant 0 : index
    %c0_7 = arith.constant 0 : index
    %28 = vector.load %arg2[%c1, %c0_6, %c0_7] : memref<3x32x24xf32, #tpu.memory_space<vmem>>, vector<1x32x24xf32>
    %29 = vector.shape_cast %28 : vector<1x32x24xf32> to vector<32x24xf32>
    %cst_8 = arith.constant dense<0.000000e+00> : vector<32x256xf32>
    %30 = tpu.matmul %29, %27, %cst_8 {dimension_numbers = #tpu.dot_dimension_numbers<[1], [0], [0], [1], [0, 0, 1, 1], [], []>} : vector<32x24xf32>, vector<24x256xf32>, vector<32x256xf32> -> vector<32x256xf32>
    %31 = arith.addf %18, %30 : vector<32x256xf32>
    %32 = vector.extract_strided_slice %2 {offsets = [0, 15], sizes = [8, 256], strides = [1, 1]} : vector<8x512xf32> to vector<8x256xf32>
    %33 = vector.extract_strided_slice %0 {offsets = [6, 0], sizes = [1, 256], strides = [1, 1]} : vector<9x256xf32> to vector<1x256xf32>
    %34 = vector.broadcast %33 : vector<1x256xf32> to vector<8x256xf32>
    %35 = arith.mulf %32, %34 : vector<8x256xf32>
    %36 = vector.extract_strided_slice %2 {offsets = [0, 16], sizes = [8, 256], strides = [1, 1]} : vector<8x512xf32> to vector<8x256xf32>
    %37 = vector.extract_strided_slice %0 {offsets = [7, 0], sizes = [1, 256], strides = [1, 1]} : vector<9x256xf32> to vector<1x256xf32>
    %38 = vector.broadcast %37 : vector<1x256xf32> to vector<8x256xf32>
    %39 = arith.mulf %36, %38 : vector<8x256xf32>
    %40 = vector.extract_strided_slice %2 {offsets = [0, 17], sizes = [8, 256], strides = [1, 1]} : vector<8x512xf32> to vector<8x256xf32>
    %41 = vector.extract_strided_slice %0 {offsets = [8, 0], sizes = [1, 256], strides = [1, 1]} : vector<9x256xf32> to vector<1x256xf32>
    %42 = vector.broadcast %41 : vector<1x256xf32> to vector<8x256xf32>
    %43 = arith.mulf %40, %42 : vector<8x256xf32>
    %44 = tpu.concatenate %35, %39, %43 in 0 : vector<8x256xf32>, vector<8x256xf32>, vector<8x256xf32> -> vector<24x256xf32>
    %c2 = arith.constant 2 : index
    %c0_9 = arith.constant 0 : index
    %c0_10 = arith.constant 0 : index
    %45 = vector.load %arg2[%c2, %c0_9, %c0_10] : memref<3x32x24xf32, #tpu.memory_space<vmem>>, vector<1x32x24xf32>
    %46 = vector.shape_cast %45 : vector<1x32x24xf32> to vector<32x24xf32>
    %cst_11 = arith.constant dense<0.000000e+00> : vector<32x256xf32>
    %47 = tpu.matmul %46, %44, %cst_11 {dimension_numbers = #tpu.dot_dimension_numbers<[1], [0], [0], [1], [0, 0, 1, 1], [], []>} : vector<32x24xf32>, vector<24x256xf32>, vector<32x256xf32> -> vector<32x256xf32>
    %48 = arith.addf %31, %47 : vector<32x256xf32>
    %c0_12 = arith.constant 0 : index
    %c0_13 = arith.constant 0 : index
    %49 = vector.load %arg3[%c0_12, %c0_13] : memref<32x1xf32, #tpu.memory_space<vmem>>, vector<32x1xf32>
    %50 = vector.broadcast %49 : vector<32x1xf32> to vector<32x256xf32>
    %51 = arith.addf %48, %50 : vector<32x256xf32>
    %cst_14 = arith.constant 0.000000e+00 : f32
    %52 = vector.broadcast %cst_14 : f32 to vector<32x256xf32>
    %53 = arith.maximumf %51, %52 : vector<32x256xf32>
    %54 = tpu.concatenate %53, %53 in 1 : vector<32x256xf32>, vector<32x256xf32> -> vector<32x512xf32>
    %55 = vector.extract_strided_slice %54 {offsets = [0, 239], sizes = [32, 256], strides = [1, 1]} : vector<32x512xf32> to vector<32x256xf32>
    %56 = vector.extract_strided_slice %0 {offsets = [0, 0], sizes = [1, 256], strides = [1, 1]} : vector<9x256xf32> to vector<1x256xf32>
    %57 = vector.broadcast %56 : vector<1x256xf32> to vector<32x256xf32>
    %58 = arith.mulf %55, %57 : vector<32x256xf32>
    %59 = vector.extract_strided_slice %54 {offsets = [0, 240], sizes = [32, 256], strides = [1, 1]} : vector<32x512xf32> to vector<32x256xf32>
    %60 = vector.extract_strided_slice %0 {offsets = [1, 0], sizes = [1, 256], strides = [1, 1]} : vector<9x256xf32> to vector<1x256xf32>
    %61 = vector.broadcast %60 : vector<1x256xf32> to vector<32x256xf32>
    %62 = arith.mulf %59, %61 : vector<32x256xf32>
    %63 = vector.extract_strided_slice %54 {offsets = [0, 241], sizes = [32, 256], strides = [1, 1]} : vector<32x512xf32> to vector<32x256xf32>
    %64 = vector.extract_strided_slice %0 {offsets = [2, 0], sizes = [1, 256], strides = [1, 1]} : vector<9x256xf32> to vector<1x256xf32>
    %65 = vector.broadcast %64 : vector<1x256xf32> to vector<32x256xf32>
    %66 = arith.mulf %63, %65 : vector<32x256xf32>
    %67 = tpu.concatenate %58, %62, %66 in 0 : vector<32x256xf32>, vector<32x256xf32>, vector<32x256xf32> -> vector<96x256xf32>
    %c0_15 = arith.constant 0 : index
    %c0_16 = arith.constant 0 : index
    %c0_17 = arith.constant 0 : index
    %68 = vector.load %arg4[%c0_15, %c0_16, %c0_17] : memref<3x8x96xf32, #tpu.memory_space<vmem>>, vector<1x8x96xf32>
    %69 = vector.shape_cast %68 : vector<1x8x96xf32> to vector<8x96xf32>
    %cst_18 = arith.constant dense<0.000000e+00> : vector<8x256xf32>
    %70 = tpu.matmul %69, %67, %cst_18 {dimension_numbers = #tpu.dot_dimension_numbers<[1], [0], [0], [1], [0, 0, 1, 1], [], []>} : vector<8x96xf32>, vector<96x256xf32>, vector<8x256xf32> -> vector<8x256xf32>
    %71 = vector.extract_strided_slice %54 {offsets = [0, 255], sizes = [32, 256], strides = [1, 1]} : vector<32x512xf32> to vector<32x256xf32>
    %72 = vector.extract_strided_slice %0 {offsets = [3, 0], sizes = [1, 256], strides = [1, 1]} : vector<9x256xf32> to vector<1x256xf32>
    %73 = vector.broadcast %72 : vector<1x256xf32> to vector<32x256xf32>
    %74 = arith.mulf %71, %73 : vector<32x256xf32>
    %75 = vector.extract_strided_slice %54 {offsets = [0, 1], sizes = [32, 256], strides = [1, 1]} : vector<32x512xf32> to vector<32x256xf32>
    %76 = vector.extract_strided_slice %0 {offsets = [5, 0], sizes = [1, 256], strides = [1, 1]} : vector<9x256xf32> to vector<1x256xf32>
    %77 = vector.broadcast %76 : vector<1x256xf32> to vector<32x256xf32>
    %78 = arith.mulf %75, %77 : vector<32x256xf32>
    %79 = tpu.concatenate %74, %53, %78 in 0 : vector<32x256xf32>, vector<32x256xf32>, vector<32x256xf32> -> vector<96x256xf32>
    %c1_19 = arith.constant 1 : index
    %c0_20 = arith.constant 0 : index
    %c0_21 = arith.constant 0 : index
    %80 = vector.load %arg4[%c1_19, %c0_20, %c0_21] : memref<3x8x96xf32, #tpu.memory_space<vmem>>, vector<1x8x96xf32>
    %81 = vector.shape_cast %80 : vector<1x8x96xf32> to vector<8x96xf32>
    %cst_22 = arith.constant dense<0.000000e+00> : vector<8x256xf32>
    %82 = tpu.matmul %81, %79, %cst_22 {dimension_numbers = #tpu.dot_dimension_numbers<[1], [0], [0], [1], [0, 0, 1, 1], [], []>} : vector<8x96xf32>, vector<96x256xf32>, vector<8x256xf32> -> vector<8x256xf32>
    %83 = arith.addf %70, %82 : vector<8x256xf32>
    %84 = vector.extract_strided_slice %54 {offsets = [0, 15], sizes = [32, 256], strides = [1, 1]} : vector<32x512xf32> to vector<32x256xf32>
    %85 = vector.extract_strided_slice %0 {offsets = [6, 0], sizes = [1, 256], strides = [1, 1]} : vector<9x256xf32> to vector<1x256xf32>
    %86 = vector.broadcast %85 : vector<1x256xf32> to vector<32x256xf32>
    %87 = arith.mulf %84, %86 : vector<32x256xf32>
    %88 = vector.extract_strided_slice %54 {offsets = [0, 16], sizes = [32, 256], strides = [1, 1]} : vector<32x512xf32> to vector<32x256xf32>
    %89 = vector.extract_strided_slice %0 {offsets = [7, 0], sizes = [1, 256], strides = [1, 1]} : vector<9x256xf32> to vector<1x256xf32>
    %90 = vector.broadcast %89 : vector<1x256xf32> to vector<32x256xf32>
    %91 = arith.mulf %88, %90 : vector<32x256xf32>
    %92 = vector.extract_strided_slice %54 {offsets = [0, 17], sizes = [32, 256], strides = [1, 1]} : vector<32x512xf32> to vector<32x256xf32>
    %93 = vector.extract_strided_slice %0 {offsets = [8, 0], sizes = [1, 256], strides = [1, 1]} : vector<9x256xf32> to vector<1x256xf32>
    %94 = vector.broadcast %93 : vector<1x256xf32> to vector<32x256xf32>
    %95 = arith.mulf %92, %94 : vector<32x256xf32>
    %96 = tpu.concatenate %87, %91, %95 in 0 : vector<32x256xf32>, vector<32x256xf32>, vector<32x256xf32> -> vector<96x256xf32>
    %c2_23 = arith.constant 2 : index
    %c0_24 = arith.constant 0 : index
    %c0_25 = arith.constant 0 : index
    %97 = vector.load %arg4[%c2_23, %c0_24, %c0_25] : memref<3x8x96xf32, #tpu.memory_space<vmem>>, vector<1x8x96xf32>
    %98 = vector.shape_cast %97 : vector<1x8x96xf32> to vector<8x96xf32>
    %cst_26 = arith.constant dense<0.000000e+00> : vector<8x256xf32>
    %99 = tpu.matmul %98, %96, %cst_26 {dimension_numbers = #tpu.dot_dimension_numbers<[1], [0], [0], [1], [0, 0, 1, 1], [], []>} : vector<8x96xf32>, vector<96x256xf32>, vector<8x256xf32> -> vector<8x256xf32>
    %100 = arith.addf %83, %99 : vector<8x256xf32>
    %c0_27 = arith.constant 0 : index
    %c0_28 = arith.constant 0 : index
    %101 = vector.load %arg5[%c0_27, %c0_28] : memref<8x1xf32, #tpu.memory_space<vmem>>, vector<8x1xf32>
    %102 = vector.broadcast %101 : vector<8x1xf32> to vector<8x256xf32>
    %103 = arith.addf %100, %102 : vector<8x256xf32>
    %c0_29 = arith.constant 0 : index
    %c0_30 = arith.constant 0 : index
    %104 = vector.load %arg7[%c0_29, %c0_30] : memref<8x256xf32, #tpu.memory_space<vmem>>, vector<8x256xf32>
    tpu.vector_store %arg7[%c0_29, %c0_30], %103 {strides = array<i32>} : memref<8x256xf32, #tpu.memory_space<vmem>>, vector<8x256xf32>,
    return
  }
  func.func @transform_0(%arg0: i32) -> (i32, i32) {
    %c0_i32 = arith.constant 0 : i32
    %c0_i32_0 = arith.constant 0 : i32
    return %c0_i32, %arg0 : i32, i32
  }
  func.func @transform_1(%arg0: i32) -> (i32, i32, i32) {
    %c0_i32 = arith.constant 0 : i32
    %c0_i32_0 = arith.constant 0 : i32
    %c0_i32_1 = arith.constant 0 : i32
    %c0_i32_2 = arith.constant 0 : i32
    return %c0_i32, %c0_i32_0, %c0_i32_1 : i32, i32, i32
  }
  func.func @transform_2(%arg0: i32) -> (i32, i32) {
    %c0_i32 = arith.constant 0 : i32
    %c0_i32_0 = arith.constant 0 : i32
    %c0_i32_1 = arith.constant 0 : i32
    return %c0_i32, %c0_i32_0 : i32, i32
  }
  func.func @transform_3(%arg0: i32) -> (i32, i32, i32) {
    %c0_i32 = arith.constant 0 : i32
    %c0_i32_0 = arith.constant 0 : i32
    %c0_i32_1 = arith.constant 0 : i32
    %c0_i32_2 = arith.constant 0 : i32
    return %c0_i32, %c0_i32_0, %c0_i32_1 : i32, i32, i32
  }
  func.func @transform_4(%arg0: i32) -> (i32, i32) {
    %c0_i32 = arith.constant 0 : i32
    %c0_i32_0 = arith.constant 0 : i32
    %c0_i32_1 = arith.constant 0 : i32
    return %c0_i32, %c0_i32_0 : i32, i32
  }
  func.func @transform_5(%arg0: i32) -> (i32, i32) {
    %c0_i32 = arith.constant 0 : i32
    %c0_i32_0 = arith.constant 0 : i32
    %c0_i32_1 = arith.constant 0 : i32
    return %c0_i32, %c0_i32_0 : i32, i32
  }
  func.func @transform_6(%arg0: i32) -> (i32, i32) {
    %c0_i32 = arith.constant 0 : i32
    %c0_i32_0 = arith.constant 0 : i32
    return %c0_i32, %arg0 : i32, i32
  }
}

</mosaic_0001>

<llo_original>
// kernel: tpu_custom_call.1
$region0: #{tpu_custom_call.1}
  #allocation0 [shape = 'u32[]', space=smem, size = 0x4, offset = 0x4, fixed_abs, tag = 'smem constant byte address 0x4 - core index']
  #allocation1 [shape = 'u32[144,128]{1,0:T(1,128)}', space=vmem, size = 0x12000, scoped, tag = 'internal scratch']
  %s0 = inlined_call_operand.vmem [shape: f32[8,512], index: 0, kind: input, shape index: {}]
  %s1 = inlined_call_operand.vmem [shape: f32[3,32,24], index: 1, kind: input, shape index: {}]
  %s2 = inlined_call_operand.vmem [shape: f32[32,1], index: 2, kind: input, shape index: {}]
  %s3 = inlined_call_operand.vmem [shape: f32[3,8,96], index: 3, kind: input, shape index: {}]
  %s4 = inlined_call_operand.vmem [shape: f32[8,1], index: 4, kind: input, shape index: {}]
  %s5 = inlined_call_operand.vmem [shape: f32[9,256], index: 5, kind: input, shape index: {}]
  %s6 = inlined_call_operand.hbm [shape: f32[8,512], index: 6, kind: output, shape index: {}]
  %s7 = sld [smem:[#allocation0]]
  $region57: #{tpu_custom_call.1} parent=0
    _
  %s9 = ssub.s32 1, %s7
  %s10 = scalar_select 0, %s9, %s7
  $region1: #{tpu_custom_call.1} parent=0
    #allocation2 [shape = 'u8[16384]{0}', space=vmem, size = 0x4000, scoped, tag = 'output window, operand 0']
    #allocation3 [shape = 's32[2]{0}', space=sflag, size = 0x8, scoped, tag = 'scoped memory for tpu_custom_call.1']
    %11 = vsyncpa [#allocation3], 0
    %s12 = scalar_lea.sflag [#allocation3], 1
    %13 = vsyncpa %s12, 0
    loop: start=0, step=1, limit=4
    $region2: #{tpu_custom_call.1} parent=1 // loop_pre_header
      _
    $region3: #{tpu_custom_call.1} parent=1 // loop_header
      %s15 = sphi 0, %s19
      %p16 = scmp.ge.s32.totalorder %s15, 4
      %s25 = sphi 0, %s27
      %s28 = sphi 0, %s25
      %s29 = sphi 0, %s28
      %s45 = sphi 0, %s29
      %s49 = sphi 0, %s49
      %s51 = sphi 0, %s49
      %s52 = sphi 0, %s51
      %s66 = sphi 0, %s52
      %s70 = sphi 0, %s70
      %s72 = sphi 0, %s70
      %s73 = sphi 0, %s72
      %s87 = sphi 0, %s73
      %s91 = sphi 0, %s91
      %s93 = sphi 0, %s91
      %s94 = sphi 0, %s93
      %s108 = sphi 0, %s94
      %s112 = sphi 0, %s112
      %s114 = sphi 0, %s112
      %s115 = sphi 0, %s114
      %s129 = sphi 0, %s115
      %s133 = sphi 0, %s133
      %s135 = sphi 0, %s133
      %s136 = sphi 0, %s135
      %s150 = sphi 0, %s136
      %s156 = sphi 0, %s158
      %s159 = sphi 0, %s156
      %s160 = sphi 0, %s159
      %s176 = sphi 0, %s160
    $region4: #{tpu_custom_call.1} parent=1 // loop_header_branch
      %18 = sbr.rel (%p16) target = $region8
    $region5: #{tpu_custom_call.1} parent=1 // loop_body
      %s20 = ssub.s32 %s15, 1
      %s21 = ssub.s32 %s15, 2
      %s22 = sadd.s32 %s15, 1
      %s23 = ssub.s32 %s15, %s22
      %p24 = scmp.eq.s32.totalorder %s23, 0
      %s26 = sadd.s32 %s25, 1
      %s27 = scalar_select %p24, %s25, %s26
      %p30 = pneg %p24
      %p31 = scmp.eq.s32.totalorder %s15, 1
      %p32 = por %p30, %p31
      %p33 = scmp.ne.s32.totalorder %s25, %s28
      %p34 = scmp.eq.s32.totalorder %s15, 0
      %p35 = por %p33, %p34
      %p36 = scmp.ne.s32.totalorder %s25, %s28
      %p37 = scmp.eq.s32.totalorder %s20, 1
      %p38 = por %p36, %p37
      %p39 = scmp.ne.s32.totalorder %s28, %s29
      %p40 = scmp.eq.s32.totalorder %s20, 0
      %p41 = por %p39, %p40
      %p42 = scmp.ne.s32.totalorder %s28, %s29
      %p43 = scmp.eq.s32.totalorder %s21, 1
      %p44 = por %p42, %p43
      %p46 = scmp.ne.s32.totalorder %s29, %s45
      %p47 = scmp.eq.s32.totalorder %s21, 0
      %p48 = por %p46, %p47
      %s50 = sadd.s32 %s49, 1
      %p53 = scmp.eq.s32.totalorder %s15, 1
      %p54 = scmp.ne.s32.totalorder %s49, %s51
      %p55 = scmp.eq.s32.totalorder %s15, 0
      %p56 = por %p54, %p55
      %p57 = scmp.ne.s32.totalorder %s49, %s51
      %p58 = scmp.eq.s32.totalorder %s20, 1
      %p59 = por %p57, %p58
      %p60 = scmp.ne.s32.totalorder %s51, %s52
      %p61 = scmp.eq.s32.totalorder %s20, 0
      %p62 = por %p60, %p61
      %p63 = scmp.ne.s32.totalorder %s51, %s52
      %p64 = scmp.eq.s32.totalorder %s21, 1
      %p65 = por %p63, %p64
      %p67 = scmp.ne.s32.totalorder %s52, %s66
      %p68 = scmp.eq.s32.totalorder %s21, 0
      %p69 = por %p67, %p68
      %s71 = sadd.s32 %s70, 1
      %p74 = scmp.eq.s32.totalorder %s15, 1
      %p75 = scmp.ne.s32.totalorder %s70, %s72
      %p76 = scmp.eq.s32.totalorder %s15, 0
      %p77 = por %p75, %p76
      %p78 = scmp.ne.s32.totalorder %s70, %s72
      %p79 = scmp.eq.s32.totalorder %s20, 1
      %p80 = por %p78, %p79
      %p81 = scmp.ne.s32.totalorder %s72, %s73
      %p82 = scmp.eq.s32.totalorder %s20, 0
      %p83 = por %p81, %p82
      %p84 = scmp.ne.s32.totalorder %s72, %s73
      %p85 = scmp.eq.s32.totalorder %s21, 1
      %p86 = por %p84, %p85
      %p88 = scmp.ne.s32.totalorder %s73, %s87
      %p89 = scmp.eq.s32.totalorder %s21, 0
      %p90 = por %p88, %p89
      %s92 = sadd.s32 %s91, 1
      %p95 = scmp.eq.s32.totalorder %s15, 1
      %p96 = scmp.ne.s32.totalorder %s91, %s93
      %p97 = scmp.eq.s32.totalorder %s15, 0
      %p98 = por %p96, %p97
      %p99 = scmp.ne.s32.totalorder %s91, %s93
      %p100 = scmp.eq.s32.totalorder %s20, 1
      %p101 = por %p99, %p100
      %p102 = scmp.ne.s32.totalorder %s93, %s94
      %p103 = scmp.eq.s32.totalorder %s20, 0
      %p104 = por %p102, %p103
      %p105 = scmp.ne.s32.totalorder %s93, %s94
      %p106 = scmp.eq.s32.totalorder %s21, 1
      %p107 = por %p105, %p106
      %p109 = scmp.ne.s32.totalorder %s94, %s108
      %p110 = scmp.eq.s32.totalorder %s21, 0
      %p111 = por %p109, %p110
      %s113 = sadd.s32 %s112, 1
      %p116 = scmp.eq.s32.totalorder %s15, 1
      %p117 = scmp.ne.s32.totalorder %s112, %s114
      %p118 = scmp.eq.s32.totalorder %s15, 0
      %p119 = por %p117, %p118
      %p120 = scmp.ne.s32.totalorder %s112, %s114
      %p121 = scmp.eq.s32.totalorder %s20, 1
      %p122 = por %p120, %p121
      %p123 = scmp.ne.s32.totalorder %s114, %s115
      %p124 = scmp.eq.s32.totalorder %s20, 0
      %p125 = por %p123, %p124
      %p126 = scmp.ne.s32.totalorder %s114, %s115
      %p127 = scmp.eq.s32.totalorder %s21, 1
      %p128 = por %p126, %p127
      %p130 = scmp.ne.s32.totalorder %s115, %s129
      %p131 = scmp.eq.s32.totalorder %s21, 0
      %p132 = por %p130, %p131
      %s134 = sadd.s32 %s133, 1
      %p137 = scmp.eq.s32.totalorder %s15, 1
      %p138 = scmp.ne.s32.totalorder %s133, %s135
      %p139 = scmp.eq.s32.totalorder %s15, 0
      %p140 = por %p138, %p139
      %p141 = scmp.ne.s32.totalorder %s133, %s135
      %p142 = scmp.eq.s32.totalorder %s20, 1
      %p143 = por %p141, %p142
      %p144 = scmp.ne.s32.totalorder %s135, %s136
      %p145 = scmp.eq.s32.totalorder %s20, 0
      %p146 = por %p144, %p145
      %p147 = scmp.ne.s32.totalorder %s135, %s136
      %p148 = scmp.eq.s32.totalorder %s21, 1
      %p149 = por %p147, %p148
      %p151 = scmp.ne.s32.totalorder %s136, %s150
      %p152 = scmp.eq.s32.totalorder %s21, 0
      %p153 = por %p151, %p152
      %s154 = ssub.s32 %s15, %s22
      %p155 = scmp.eq.s32.totalorder %s154, 0
      %s157 = sadd.s32 %s156, 1
      %s158 = scalar_select %p155, %s156, %s157
      %p161 = pneg %p155
      %p162 = scmp.eq.s32.totalorder %s15, 1
      %p163 = por %p161, %p162
      %p164 = scmp.ne.s32.totalorder %s156, %s159
      %p165 = scmp.eq.s32.totalorder %s15, 0
      %p166 = por %p164, %p165
      %p167 = scmp.ne.s32.totalorder %s156, %s159
      %p168 = scmp.eq.s32.totalorder %s20, 1
      %p169 = por %p167, %p168
      %p170 = scmp.ne.s32.totalorder %s159, %s160
      %p171 = scmp.eq.s32.totalorder %s20, 0
      %p172 = por %p170, %p171
      %p173 = scmp.ne.s32.totalorder %s159, %s160
      %p174 = scmp.eq.s32.totalorder %s21, 1
      %p175 = por %p173, %p174
      %p177 = scmp.ne.s32.totalorder %s160, %s176
      %p178 = scmp.eq.s32.totalorder %s21, 0
      %p179 = por %p177, %p178
      %p180 = scmp.le.s32.totalorder 1, %s15
      %p181 = scmp.lt.s32.totalorder %s15, 3
      %p182 = pnand %p180, %p181
      %p183 = pneg %p182
      // Predicated region
      $region9: #{tpu_custom_call.1} parent=5 // pred_check
        _
      $region10: #{tpu_custom_call.1} parent=5 // pred_check_branch
        %185 = sbr.rel (%p182) target = $region12
      $region11: #{tpu_custom_call.1} parent=5 // pred_region
        %s186 = ssub.s32 %s15, 1
        // Predicated region
        $region13: #{tpu_custom_call.1} parent=11 // pred_check
          %p187 = pneg %p62
        $region14: #{tpu_custom_call.1} parent=11 // pred_check_branch
          %189 = sbr.rel (%p187) target = $region16
        $region15: #{tpu_custom_call.1} parent=11 // pred_region
          _
        $region16: #{tpu_custom_call.1} parent=11 // pred_fallthru
          _
        // Predicated region
        $region17: #{tpu_custom_call.1} parent=11 // pred_check
          %p190 = pneg %p83
        $region18: #{tpu_custom_call.1} parent=11 // pred_check_branch
          %192 = sbr.rel (%p190) target = $region20
        $region19: #{tpu_custom_call.1} parent=11 // pred_region
          _
        $region20: #{tpu_custom_call.1} parent=11 // pred_fallthru
          _
        // Predicated region
        $region21: #{tpu_custom_call.1} parent=11 // pred_check
          %p193 = pneg %p104
        $region22: #{tpu_custom_call.1} parent=11 // pred_check_branch
          %195 = sbr.rel (%p193) target = $region24
        $region23: #{tpu_custom_call.1} parent=11 // pred_region
          _
        $region24: #{tpu_custom_call.1} parent=11 // pred_fallthru
          _
        // Predicated region
        $region25: #{tpu_custom_call.1} parent=11 // pred_check
          %p196 = pneg %p125
        $region26: #{tpu_custom_call.1} parent=11 // pred_check_branch
          %198 = sbr.rel (%p196) target = $region28
        $region27: #{tpu_custom_call.1} parent=11 // pred_region
          _
        $region28: #{tpu_custom_call.1} parent=11 // pred_fallthru
          _
        // Predicated region
        $region29: #{tpu_custom_call.1} parent=11 // pred_check
          %p199 = pneg %p146
        $region30: #{tpu_custom_call.1} parent=11 // pred_check_branch
          %201 = sbr.rel (%p199) target = $region32
        $region31: #{tpu_custom_call.1} parent=11 // pred_region
          _
        $region32: #{tpu_custom_call.1} parent=11 // pred_fallthru
          _
      $region12: #{tpu_custom_call.1} parent=5 // pred_fallthru
        _
      %p202 = scmp.lt.s32.totalorder %s15, 2
      // Predicated region
      $region33: #{tpu_custom_call.1} parent=5 // pred_check
        %p203 = pneg %p202
      $region34: #{tpu_custom_call.1} parent=5 // pred_check_branch
        %205 = sbr.rel (%p203) target = $region36
      $region35: #{tpu_custom_call.1} parent=5 // pred_region
        // Predicated region
        $region37: #{tpu_custom_call.1} parent=35 // pred_check
          %p206 = pneg %p35
        $region38: #{tpu_custom_call.1} parent=35 // pred_check_branch
          %208 = sbr.rel (%p206) target = $region40
        $region39: #{tpu_custom_call.1} parent=35 // pred_region
          %s209 = smul.u32 2, %s15
          %p210 = scmp.lt.s32.totalorder %s209, 3
          %s211 = scalar_select %p210, %s209, 3
          %s212 = smul.addr %s211, 8
          %s213 = scalar_lea.vmem %s0, %s212
          %s214 = smul.u32 2, %s15
        $region40: #{tpu_custom_call.1} parent=35 // pred_fallthru
          _
      $region36: #{tpu_custom_call.1} parent=5 // pred_fallthru
        _
      %p215 = scmp.le.s32.totalorder 1, %s15
      %p216 = scmp.lt.s32.totalorder %s15, 3
      %p217 = pnand %p215, %p216
      %p218 = pneg %p217
      // Predicated region
      $region41: #{tpu_custom_call.1} parent=5 // pred_check
        _
      $region42: #{tpu_custom_call.1} parent=5 // pred_check_branch
        %220 = sbr.rel (%p217) target = $region44
      $region43: #{tpu_custom_call.1} parent=5 // pred_region
        %s221 = ssub.s32 %s15, 1
        %s222 = smul.u32 2, %s20
        %p223 = scmp.lt.s32.totalorder %s222, 3
        %s224 = scalar_select %p223, %s222, 3
        %s225 = smul.addr %s224, 8
        %s226 = scalar_lea.vmem %s0, %s225
        %p227 = pneg %p41
        %p228 = pneg %p38
        %p229 = pneg %p62
        %p230 = pneg %p59
        %p231 = pneg %p83
        %p232 = pneg %p80
        %p233 = pneg %p104
        %p234 = pneg %p101
        %p235 = pneg %p125
        %p236 = pneg %p122
        %p237 = pneg %p146
        %p238 = pneg %p143
        %p239 = pneg %p172
        %p240 = pneg %p169
        %s241 = sand.u32 %s159, 1
        %s242 = scalar_lea.sflag [#allocation3], %s241
        %s243 = sand.u32 %s159, 1
        %s244 = smul.addr %s243, 16
        %s245 = scalar_lea.vmem [#allocation2], %s244
        %s246 = smul.u32 2, %s20
        %p247 = scmp.lt.s32.totalorder %s246, 3
        %s248 = scalar_select %p247, %s246, 3
        %s249 = smul.addr %s248, 8
        %s250 = scalar_lea.vmem %s0, %s249
        %s251 = smul.u32 2, %s20
        %s252 = smul.u32 2, %s20
        %v253 = vld [vmem:[%s5] sm:$0xff]
        %v254 = vld [vmem:[%s5 + $0x8] sm:$0xff]
        %v255 = vld [vmem:[%s5 + $0x10] sm:$0x1]
        %v256 = vld [vmem:[%s5 + $0x18] sm:$0x1]
        %v257 = vld [vmem:[%s250] sm:$0xff]
        %v258 = vld [vmem:[%s250 + $0x8] sm:$0xff]
        %v259 = vlaneseq
        %v260 = vshrl.u32 %v259, 7
        %v261 = vsub.s32 0, %v260
        %v262 = vrot.slane %v253, %v261
        %v263 = vlaneseq
        %v264 = vshrl.u32 %v263, 7
        %v265 = vsub.s32 0, %v264
        %v266 = vrot.slane %v254, %v265
        %269 = vrot.lane.b32.xlu0 %v262, 111
        %v270 = vpop.permute.xlu0 %269
        %271 = vrot.lane.b32.xlu0 %v266, 111
        %v272 = vpop.permute.xlu0 %271
        %vm273 = vcmask 908288
        %v274 = vsel %vm273, %v270, %v272
        %v278 = vmul.f32 %v258, %v270
        %v279 = vmul.f32 %v257, %v274
        %v280 = vmul.f32 %v258, %v272
        %v281 = vlaneseq
        %v282 = vshrl.u32 %v281, 7
        %v283 = vsub.s32 1, %v282
        %v284 = vrot.slane %v253, %v283
        %v285 = vlaneseq
        %v286 = vshrl.u32 %v285, 7
        %v287 = vsub.s32 1, %v286
        %v288 = vrot.slane %v254, %v287
        %291 = vrot.lane.b32.xlu0 %v284, 112
        %v292 = vpop.permute.xlu0 %291
        %293 = vrot.lane.b32.xlu0 %v288, 112
        %v294 = vpop.permute.xlu0 %293
        %vm295 = vcmask 916480
        %v296 = vsel %vm295, %v292, %v294
        %v300 = vmul.f32 %v258, %v292
        %v301 = vmul.f32 %v257, %v296
        %v302 = vmul.f32 %v258, %v294
        %v303 = vlaneseq
        %v304 = vshrl.u32 %v303, 7
        %v305 = vsub.s32 2, %v304
        %v306 = vrot.slane %v253, %v305
        %v307 = vlaneseq
        %v308 = vshrl.u32 %v307, 7
        %v309 = vsub.s32 2, %v308
        %v310 = vrot.slane %v254, %v309
        %313 = vrot.lane.b32.xlu0 %v306, 113
        %v314 = vpop.permute.xlu0 %313
        %315 = vrot.lane.b32.xlu0 %v310, 113
        %v316 = vpop.permute.xlu0 %315
        %vm317 = vcmask 924672
        %v318 = vsel %vm317, %v314, %v316
        %v322 = vmul.f32 %v258, %v314
        %v323 = vmul.f32 %v257, %v318
        %v324 = vmul.f32 %v258, %v316
        %328 = vrot.lane.b32.xlu0 %v300, 127
        %v329 = vpop.permute.xlu0 %328
        %330 = vrot.lane.b32.xlu0 %v301, 127
        %v331 = vpop.permute.xlu0 %330
        %332 = vrot.lane.b32.xlu0 %v302, 127
        %v333 = vpop.permute.xlu0 %332
        %vm334 = vcmask 1039360
        %v335 = vsel %vm334, %v329, %v331
        %v336 = vsel %vm334, %v331, %v333
        %340 = vrot.lane.b32.xlu0 %v322, 126
        %v341 = vpop.permute.xlu0 %340
        %342 = vrot.lane.b32.xlu0 %v323, 126
        %v343 = vpop.permute.xlu0 %342
        %344 = vrot.lane.b32.xlu0 %v324, 126
        %v345 = vpop.permute.xlu0 %344
        %vm346 = vcmask 1031168
        %v347 = vsel %vm346, %v341, %v343
        %v348 = vsel %vm346, %v343, %v345
        %v349 = vld [vmem:[%s1] sm:$0xff]
        %v350 = vld [vmem:[%s1 + $0x8] sm:$0xff]
        %v351 = vld [vmem:[%s1 + $0x10] sm:$0xff]
        %v352 = vld [vmem:[%s1 + $0x18] sm:$0xff]
        %v353 = vlaneseq
        %v354 = vshrl.u32 %v353, 7
        %v355 = vsub.s32 3, %v354
        %v356 = vrot.slane %v253, %v355
        %v357 = vlaneseq
        %v358 = vshrl.u32 %v357, 7
        %v359 = vsub.s32 3, %v358
        %v360 = vrot.slane %v254, %v359
        %363 = vrot.lane.b32.xlu0 %v356, 127
        %v364 = vpop.permute.xlu0 %363
        %365 = vrot.lane.b32.xlu0 %v360, 127
        %v366 = vpop.permute.xlu0 %365
        %v367 = vsel %vm334, %v364, %v366
        %v371 = vmul.f32 %v258, %v364
        %v372 = vmul.f32 %v257, %v367
        %v373 = vmul.f32 %v258, %v366
        %v374 = vlaneseq
        %v375 = vshrl.u32 %v374, 7
        %v376 = vsub.s32 5, %v375
        %v377 = vrot.slane %v253, %v376
        %v378 = vlaneseq
        %v379 = vshrl.u32 %v378, 7
        %v380 = vsub.s32 5, %v379
        %v381 = vrot.slane %v254, %v380
        %384 = vrot.lane.b32.xlu0 %v377, 1
        %v385 = vpop.permute.xlu0 %384
        %386 = vrot.lane.b32.xlu0 %v381, 1
        %v387 = vpop.permute.xlu0 %386
        %vm388 = vcmask 7168
        %v389 = vsel %vm388, %v385, %v387
        %v393 = vmul.f32 %v257, %v385
        %v394 = vmul.f32 %v258, %v389
        %v395 = vmul.f32 %v257, %v387
        %398 = vrot.lane.b32.xlu0 %v257, 127
        %v399 = vpop.permute.xlu0 %398
        %400 = vrot.lane.b32.xlu0 %v258, 127
        %v401 = vpop.permute.xlu0 %400
        %v402 = vsel %vm334, %v399, %v401
        %406 = vrot.lane.b32.xlu0 %v393, 126
        %v407 = vpop.permute.xlu0 %406
        %408 = vrot.lane.b32.xlu0 %v394, 126
        %v409 = vpop.permute.xlu0 %408
        %410 = vrot.lane.b32.xlu0 %v395, 126
        %v411 = vpop.permute.xlu0 %410
        %v412 = vsel %vm346, %v407, %v409
        %v413 = vsel %vm346, %v409, %v411
        %s414 = scalar_lea.vmem %s1, 32
        %v415 = vld [vmem:[%s414] sm:$0xff]
        %v416 = vld [vmem:[%s414 + $0x8] sm:$0xff]
        %v417 = vld [vmem:[%s414 + $0x10] sm:$0xff]
        %v418 = vld [vmem:[%s414 + $0x18] sm:$0xff]
        %422 = vrot.lane.b32.xlu0 %v371, 1
        %v423 = vpop.permute.xlu0 %422
        %424 = vrot.lane.b32.xlu0 %v372, 1
        %v425 = vpop.permute.xlu0 %424
        %426 = vrot.lane.b32.xlu0 %v373, 1
        %v427 = vpop.permute.xlu0 %426
        %428 = vrot.lane.b32.xlu0 %v399, 1
        %v429 = vpop.permute.xlu0 %428
        %430 = vrot.lane.b32.xlu0 %v402, 1
        %v431 = vpop.permute.xlu0 %430
        %432 = vrot.lane.b32.xlu0 %v401, 1
        %v433 = vpop.permute.xlu0 %432
        %434 = vrot.lane.b32.xlu0 %v407, 1
        %v435 = vpop.permute.xlu0 %434
        %436 = vrot.lane.b32.xlu0 %v412, 1
        %v437 = vpop.permute.xlu0 %436
        %438 = vrot.lane.b32.xlu0 %v413, 1
        %v439 = vpop.permute.xlu0 %438
        %v440 = vsel %vm388, %v423, %v425
        %v441 = vsel %vm388, %v425, %v427
        %v442 = vsel %vm388, %v429, %v431
        %v443 = vsel %vm388, %v431, %v433
        %v444 = vsel %vm388, %v435, %v437
        %v445 = vsel %vm388, %v437, %v439
        %vm452 = vcmask 195584
        %v454 = vsel %vm452, %v415, 0
        %v457 = vsel %vm452, %v416, 0
        %v460 = vsel %vm452, %v417, 0
        %v463 = vsel %vm452, %v418, 0
        %465 = vmatprep.subr.mxu0 0.0
        %466 = vmatpush1.msra.mxu0 0.0
        %467 = vmatprep.subr.mxu0 0.0
        %468 = vmatpush1.msra.mxu0 0.0
        %469 = vmatprep.subr.mxu0 0.0
        %470 = vmatpush1.msra.mxu0 0.0
        %471 = vmatprep.subr.mxu0 0.0
        %472 = vmatpush1.msra.mxu0 0.0
        %473 = vmatprep.subr.mxu0 0.0
        %474 = vmatpush1.msra.mxu0 0.0
        %475 = vmatprep.subr.mxu0 0.0
        %476 = vmatpush1.msra.mxu0 0.0
        %477 = vmatprep.subr.mxu0 0.0
        %478 = vmatpush1.msra.mxu0 0.0
        %479 = vmatprep.subr.mxu0 0.0
        %480 = vmatpush1.msra.mxu0 0.0
        %481 = vmatprep.subr.mxu0 0.0
        %482 = vmatpush1.msra.mxu0 0.0
        %483 = vmatprep.subr.mxu0 0.0
        %484 = vmatpush1.msra.mxu0 0.0
        %485 = vmatprep.subr.mxu0 0.0
        %486 = vmatpush1.msra.mxu0 0.0
        %487 = vmatprep.subr.mxu0 0.0
        %488 = vmatpush1.msra.mxu0 0.0
        %489 = vmatprep.subr.mxu0 0.0
        %490 = vmatpush1.msra.mxu0 0.0
        %491 = vmatprep.subr.mxu0 %v445
        %492 = vmatpush1.msra.mxu0 %v444
        %493 = vmatprep.subr.mxu0 %v443
        %494 = vmatpush1.msra.mxu0 %v442
        %495 = vmatprep.subr.mxu0 %v441
        %496 = vmatpush1.msra.mxu0 %v440
        %497 = vmatprep.subr.mxu0 0.0
        %498 = vmatpush2.msra.mxu0 0.0
        %499 = vmatprep.subr.mxu0 0.0
        %500 = vmatpush2.msra.mxu0 0.0
        %501 = vmatprep.subr.mxu0 0.0
        %502 = vmatpush2.msra.mxu0 0.0
        %503 = vmatprep.subr.mxu0 0.0
        %504 = vmatpush2.msra.mxu0 0.0
        %505 = vmatprep.subr.mxu0 0.0
        %506 = vmatpush2.msra.mxu0 0.0
        %507 = vmatprep.subr.mxu0 0.0
        %508 = vmatpush2.msra.mxu0 0.0
        %509 = vmatprep.subr.mxu0 0.0
        %510 = vmatpush2.msra.mxu0 0.0
        %511 = vmatprep.subr.mxu0 0.0
        %512 = vmatpush2.msra.mxu0 0.0
        %513 = vmatprep.subr.mxu0 0.0
        %514 = vmatpush2.msra.mxu0 0.0
        %515 = vmatprep.subr.mxu0 0.0
        %516 = vmatpush2.msra.mxu0 0.0
        %517 = vmatprep.subr.mxu0 0.0
        %518 = vmatpush2.msra.mxu0 0.0
        %519 = vmatprep.subr.mxu0 0.0
        %520 = vmatpush2.msra.mxu0 0.0
        %521 = vmatprep.subr.mxu0 0.0
        %522 = vmatpush2.msra.mxu0 0.0
        %523 = vmatprep.subr.mxu0 0.0
        %524 = vmatpush2.msra.mxu0 0.0
        %525 = vmatprep.subr.mxu0 0.0
        %526 = vmatpush2.msra.mxu0 0.0
        %527 = vmatprep.subr.mxu0 0.0
        %528 = vmatpush2.msra.mxu0 0.0
        %529 = vmatprep.mubr.f32.mxu0 0.0
        %530 = vmatmul.mubr.f32.gmra.mxu0 %v454
        %v531 = vpop.f32.mrf.mxu0
        %v532 = vadd.f32 0.0, %v531
        %v533 = vpop.f32.mrf.mxu0
        %v534 = vadd.f32 0.0, %v533
        %535 = vmatprep.mubr.f32.mxu0 0.0
        %536 = vmatmul.mubr.f32.gmra.mxu0 %v457
        %v537 = vpop.f32.mrf.mxu0
        %v538 = vadd.f32 0.0, %v537
        %v539 = vpop.f32.mrf.mxu0
        %v540 = vadd.f32 0.0, %v539
        %541 = vmatprep.mubr.f32.mxu0 0.0
        %542 = vmatmul.mubr.f32.gmra.mxu0 %v460
        %v543 = vpop.f32.mrf.mxu0
        %v544 = vadd.f32 0.0, %v543
        %v545 = vpop.f32.mrf.mxu0
        %v546 = vadd.f32 0.0, %v545
        %547 = vmatprep.mubr.f32.mxu0 0.0
        %548 = vmatmul.mubr.f32.gmra.mxu0 %v463
        %v549 = vpop.f32.mrf.mxu0
        %v550 = vadd.f32 0.0, %v549
        %v551 = vpop.f32.mrf.mxu0
        %v552 = vadd.f32 0.0, %v551
        %553 = vdwg.mxu0
        %557 = vrot.lane.b32.xlu0 %v278, 17
        %v558 = vpop.permute.xlu0 %557
        %559 = vrot.lane.b32.xlu0 %v279, 17
        %v560 = vpop.permute.xlu0 %559
        %561 = vrot.lane.b32.xlu0 %v280, 17
        %v562 = vpop.permute.xlu0 %561
        %563 = vrot.lane.b32.xlu0 %v335, 17
        %v564 = vpop.permute.xlu0 %563
        %565 = vrot.lane.b32.xlu0 %v336, 17
        %v566 = vpop.permute.xlu0 %565
        %567 = vrot.lane.b32.xlu0 %v333, 17
        %v568 = vpop.permute.xlu0 %567
        %569 = vrot.lane.b32.xlu0 %v347, 17
        %v570 = vpop.permute.xlu0 %569
        %571 = vrot.lane.b32.xlu0 %v348, 17
        %v572 = vpop.permute.xlu0 %571
        %573 = vrot.lane.b32.xlu0 %v345, 17
        %v574 = vpop.permute.xlu0 %573
        %vm575 = vcmask 138240
        %v576 = vsel %vm575, %v558, %v560
        %v577 = vsel %vm575, %v560, %v562
        %v578 = vsel %vm575, %v564, %v566
        %v579 = vsel %vm575, %v566, %v568
        %v580 = vsel %vm575, %v570, %v572
        %v581 = vsel %vm575, %v572, %v574
        %v589 = vsel %vm452, %v349, 0
        %v592 = vsel %vm452, %v350, 0
        %v595 = vsel %vm452, %v351, 0
        %v598 = vsel %vm452, %v352, 0
        %600 = vmatprep.subr.mxu0 0.0
        %601 = vmatpush1.msra.mxu0 0.0
        %602 = vmatprep.subr.mxu0 0.0
        %603 = vmatpush1.msra.mxu0 0.0
        %604 = vmatprep.subr.mxu0 0.0
        %605 = vmatpush1.msra.mxu0 0.0
        %606 = vmatprep.subr.mxu0 0.0
        %607 = vmatpush1.msra.mxu0 0.0
        %608 = vmatprep.subr.mxu0 0.0
        %609 = vmatpush1.msra.mxu0 0.0
        %610 = vmatprep.subr.mxu0 0.0
        %611 = vmatpush1.msra.mxu0 0.0
        %612 = vmatprep.subr.mxu0 0.0
        %613 = vmatpush1.msra.mxu0 0.0
        %614 = vmatprep.subr.mxu0 0.0
        %615 = vmatpush1.msra.mxu0 0.0
        %616 = vmatprep.subr.mxu0 0.0
        %617 = vmatpush1.msra.mxu0 0.0
        %618 = vmatprep.subr.mxu0 0.0
        %619 = vmatpush1.msra.mxu0 0.0
        %620 = vmatprep.subr.mxu0 0.0
        %621 = vmatpush1.msra.mxu0 0.0
        %622 = vmatprep.subr.mxu0 0.0
        %623 = vmatpush1.msra.mxu0 0.0
        %624 = vmatprep.subr.mxu0 0.0
        %625 = vmatpush1.msra.mxu0 0.0
        %626 = vmatprep.subr.mxu0 %v581
        %627 = vmatpush1.msra.mxu0 %v580
        %628 = vmatprep.subr.mxu0 %v579
        %629 = vmatpush1.msra.mxu0 %v578
        %630 = vmatprep.subr.mxu0 %v577
        %631 = vmatpush1.msra.mxu0 %v576
        %632 = vmatprep.subr.mxu0 0.0
        %633 = vmatpush2.msra.mxu0 0.0
        %634 = vmatprep.subr.mxu0 0.0
        %635 = vmatpush2.msra.mxu0 0.0
        %636 = vmatprep.subr.mxu0 0.0
        %637 = vmatpush2.msra.mxu0 0.0
        %638 = vmatprep.subr.mxu0 0.0
        %639 = vmatpush2.msra.mxu0 0.0
        %640 = vmatprep.subr.mxu0 0.0
        %641 = vmatpush2.msra.mxu0 0.0
        %642 = vmatprep.subr.mxu0 0.0
        %643 = vmatpush2.msra.mxu0 0.0
        %644 = vmatprep.subr.mxu0 0.0
        %645 = vmatpush2.msra.mxu0 0.0
        %646 = vmatprep.subr.mxu0 0.0
        %647 = vmatpush2.msra.mxu0 0.0
        %648 = vmatprep.subr.mxu0 0.0
        %649 = vmatpush2.msra.mxu0 0.0
        %650 = vmatprep.subr.mxu0 0.0
        %651 = vmatpush2.msra.mxu0 0.0
        %652 = vmatprep.subr.mxu0 0.0
        %653 = vmatpush2.msra.mxu0 0.0
        %654 = vmatprep.subr.mxu0 0.0
        %655 = vmatpush2.msra.mxu0 0.0
        %656 = vmatprep.subr.mxu0 0.0
        %657 = vmatpush2.msra.mxu0 0.0
        %658 = vmatprep.subr.mxu0 0.0
        %659 = vmatpush2.msra.mxu0 0.0
        %660 = vmatprep.subr.mxu0 0.0
        %661 = vmatpush2.msra.mxu0 0.0
        %662 = vmatprep.subr.mxu0 0.0
        %663 = vmatpush2.msra.mxu0 0.0
        %664 = vmatprep.mubr.f32.mxu0 0.0
        %665 = vmatmul.mubr.f32.gmra.mxu0 %v589
        %v666 = vpop.f32.mrf.mxu0
        %v667 = vadd.f32 %v532, %v666
        %v668 = vpop.f32.mrf.mxu0
        %v669 = vadd.f32 %v534, %v668
        %670 = vmatprep.mubr.f32.mxu0 0.0
        %671 = vmatmul.mubr.f32.gmra.mxu0 %v592
        %v672 = vpop.f32.mrf.mxu0
        %v673 = vadd.f32 %v538, %v672
        %v674 = vpop.f32.mrf.mxu0
        %v675 = vadd.f32 %v540, %v674
        %676 = vmatprep.mubr.f32.mxu0 0.0
        %677 = vmatmul.mubr.f32.gmra.mxu0 %v595
        %v678 = vpop.f32.mrf.mxu0
        %v679 = vadd.f32 %v544, %v678
        %v680 = vpop.f32.mrf.mxu0
        %v681 = vadd.f32 %v546, %v680
        %682 = vmatprep.mubr.f32.mxu0 0.0
        %683 = vmatmul.mubr.f32.gmra.mxu0 %v598
        %v684 = vpop.f32.mrf.mxu0
        %v685 = vadd.f32 %v550, %v684
        %v686 = vpop.f32.mrf.mxu0
        %v687 = vadd.f32 %v552, %v686
        %688 = vdwg.mxu0
        %v689 = vlaneseq
        %v690 = vshrl.u32 %v689, 7
        %v691 = vsub.s32 6, %v690
        %v692 = vrot.slane %v253, %v691
        %v693 = vlaneseq
        %v694 = vshrl.u32 %v693, 7
        %v695 = vsub.s32 6, %v694
        %v696 = vrot.slane %v254, %v695
        %699 = vrot.lane.b32.xlu0 %v692, 15
        %v700 = vpop.permute.xlu0 %699
        %701 = vrot.lane.b32.xlu0 %v696, 15
        %v702 = vpop.permute.xlu0 %701
        %vm703 = vcmask 121856
        %v704 = vsel %vm703, %v700, %v702
        %v708 = vmul.f32 %v257, %v700
        %v709 = vmul.f32 %v258, %v704
        %v710 = vmul.f32 %v257, %v702
        %v711 = vlaneseq
        %v712 = vshrl.u32 %v711, 7
        %v713 = vsub.s32 7, %v712
        %v714 = vrot.slane %v253, %v713
        %v715 = vlaneseq
        %v716 = vshrl.u32 %v715, 7
        %v717 = vsub.s32 7, %v716
        %v718 = vrot.slane %v254, %v717
        %721 = vrot.lane.b32.xlu0 %v714, 16
        %v722 = vpop.permute.xlu0 %721
        %723 = vrot.lane.b32.xlu0 %v718, 16
        %v724 = vpop.permute.xlu0 %723
        %vm725 = vcmask 130048
        %v726 = vsel %vm725, %v722, %v724
        %v730 = vmul.f32 %v257, %v722
        %v731 = vmul.f32 %v258, %v726
        %v732 = vmul.f32 %v257, %v724
        %v733 = vlaneseq
        %v734 = vshrl.u32 %v733, 7
        %v735 = vsub.s32 0, %v734
        %v736 = vrot.slane %v255, %v735
        %v737 = vlaneseq
        %v738 = vshrl.u32 %v737, 7
        %v739 = vsub.s32 0, %v738
        %v740 = vrot.slane %v256, %v739
        %743 = vrot.lane.b32.xlu0 %v736, 17
        %v744 = vpop.permute.xlu0 %743
        %745 = vrot.lane.b32.xlu0 %v740, 17
        %v746 = vpop.permute.xlu0 %745
        %v747 = vsel %vm575, %v744, %v746
        %v751 = vmul.f32 %v257, %v744
        %v752 = vmul.f32 %v258, %v747
        %v753 = vmul.f32 %v257, %v746
        %757 = vrot.lane.b32.xlu0 %v730, 127
        %v758 = vpop.permute.xlu0 %757
        %759 = vrot.lane.b32.xlu0 %v731, 127
        %v760 = vpop.permute.xlu0 %759
        %761 = vrot.lane.b32.xlu0 %v732, 127
        %v762 = vpop.permute.xlu0 %761
        %v763 = vsel %vm334, %v758, %v760
        %v764 = vsel %vm334, %v760, %v762
        %768 = vrot.lane.b32.xlu0 %v751, 126
        %v769 = vpop.permute.xlu0 %768
        %770 = vrot.lane.b32.xlu0 %v752, 126
        %v771 = vpop.permute.xlu0 %770
        %772 = vrot.lane.b32.xlu0 %v753, 126
        %v773 = vpop.permute.xlu0 %772
        %v774 = vsel %vm346, %v769, %v771
        %v775 = vsel %vm346, %v771, %v773
        %s776 = scalar_lea.vmem %s1, 64
        %v777 = vld [vmem:[%s776] sm:$0xff]
        %v778 = vld [vmem:[%s776 + $0x8] sm:$0xff]
        %v779 = vld [vmem:[%s776 + $0x10] sm:$0xff]
        %v780 = vld [vmem:[%s776 + $0x18] sm:$0xff]
        %784 = vrot.lane.b32.xlu0 %v708, 113
        %v785 = vpop.permute.xlu0 %784
        %786 = vrot.lane.b32.xlu0 %v709, 113
        %v787 = vpop.permute.xlu0 %786
        %788 = vrot.lane.b32.xlu0 %v710, 113
        %v789 = vpop.permute.xlu0 %788
        %790 = vrot.lane.b32.xlu0 %v763, 113
        %v791 = vpop.permute.xlu0 %790
        %792 = vrot.lane.b32.xlu0 %v764, 113
        %v793 = vpop.permute.xlu0 %792
        %794 = vrot.lane.b32.xlu0 %v762, 113
        %v795 = vpop.permute.xlu0 %794
        %796 = vrot.lane.b32.xlu0 %v774, 113
        %v797 = vpop.permute.xlu0 %796
        %798 = vrot.lane.b32.xlu0 %v775, 113
        %v799 = vpop.permute.xlu0 %798
        %800 = vrot.lane.b32.xlu0 %v773, 113
        %v801 = vpop.permute.xlu0 %800
        %v802 = vsel %vm317, %v785, %v787
        %v803 = vsel %vm317, %v787, %v789
        %v804 = vsel %vm317, %v791, %v793
        %v805 = vsel %vm317, %v793, %v795
        %v806 = vsel %vm317, %v797, %v799
        %v807 = vsel %vm317, %v799, %v801
        %v815 = vsel %vm452, %v777, 0
        %v818 = vsel %vm452, %v778, 0
        %v821 = vsel %vm452, %v779, 0
        %v824 = vsel %vm452, %v780, 0
        %826 = vmatprep.subr.mxu0 0.0
        %827 = vmatpush1.msra.mxu0 0.0
        %828 = vmatprep.subr.mxu0 0.0
        %829 = vmatpush1.msra.mxu0 0.0
        %830 = vmatprep.subr.mxu0 0.0
        %831 = vmatpush1.msra.mxu0 0.0
        %832 = vmatprep.subr.mxu0 0.0
        %833 = vmatpush1.msra.mxu0 0.0
        %834 = vmatprep.subr.mxu0 0.0
        %835 = vmatpush1.msra.mxu0 0.0
        %836 = vmatprep.subr.mxu0 0.0
        %837 = vmatpush1.msra.mxu0 0.0
        %838 = vmatprep.subr.mxu0 0.0
        %839 = vmatpush1.msra.mxu0 0.0
        %840 = vmatprep.subr.mxu0 0.0
        %841 = vmatpush1.msra.mxu0 0.0
        %842 = vmatprep.subr.mxu0 0.0
        %843 = vmatpush1.msra.mxu0 0.0
        %844 = vmatprep.subr.mxu0 0.0
        %845 = vmatpush1.msra.mxu0 0.0
        %846 = vmatprep.subr.mxu0 0.0
        %847 = vmatpush1.msra.mxu0 0.0
        %848 = vmatprep.subr.mxu0 0.0
        %849 = vmatpush1.msra.mxu0 0.0
        %850 = vmatprep.subr.mxu0 0.0
        %851 = vmatpush1.msra.mxu0 0.0
        %852 = vmatprep.subr.mxu0 %v807
        %853 = vmatpush1.msra.mxu0 %v806
        %854 = vmatprep.subr.mxu0 %v805
        %855 = vmatpush1.msra.mxu0 %v804
        %856 = vmatprep.subr.mxu0 %v803
        %857 = vmatpush1.msra.mxu0 %v802
        %858 = vmatprep.subr.mxu0 0.0
        %859 = vmatpush2.msra.mxu0 0.0
        %860 = vmatprep.subr.mxu0 0.0
        %861 = vmatpush2.msra.mxu0 0.0
        %862 = vmatprep.subr.mxu0 0.0
        %863 = vmatpush2.msra.mxu0 0.0
        %864 = vmatprep.subr.mxu0 0.0
        %865 = vmatpush2.msra.mxu0 0.0
        %866 = vmatprep.subr.mxu0 0.0
        %867 = vmatpush2.msra.mxu0 0.0
        %868 = vmatprep.subr.mxu0 0.0
        %869 = vmatpush2.msra.mxu0 0.0
        %870 = vmatprep.subr.mxu0 0.0
        %871 = vmatpush2.msra.mxu0 0.0
        %872 = vmatprep.subr.mxu0 0.0
        %873 = vmatpush2.msra.mxu0 0.0
        %874 = vmatprep.subr.mxu0 0.0
        %875 = vmatpush2.msra.mxu0 0.0
        %876 = vmatprep.subr.mxu0 0.0
        %877 = vmatpush2.msra.mxu0 0.0
        %878 = vmatprep.subr.mxu0 0.0
        %879 = vmatpush2.msra.mxu0 0.0
        %880 = vmatprep.subr.mxu0 0.0
        %881 = vmatpush2.msra.mxu0 0.0
        %882 = vmatprep.subr.mxu0 0.0
        %883 = vmatpush2.msra.mxu0 0.0
        %884 = vmatprep.subr.mxu0 0.0
        %885 = vmatpush2.msra.mxu0 0.0
        %886 = vmatprep.subr.mxu0 0.0
        %887 = vmatpush2.msra.mxu0 0.0
        %888 = vmatprep.subr.mxu0 0.0
        %889 = vmatpush2.msra.mxu0 0.0
        %890 = vmatprep.mubr.f32.mxu0 0.0
        %891 = vmatmul.mubr.f32.gmra.mxu0 %v815
        %v892 = vpop.f32.mrf.mxu0
        %v893 = vadd.f32 0.0, %v892
        %v894 = vpop.f32.mrf.mxu0
        %v895 = vadd.f32 0.0, %v894
        %896 = vmatprep.mubr.f32.mxu0 0.0
        %897 = vmatmul.mubr.f32.gmra.mxu0 %v818
        %v898 = vpop.f32.mrf.mxu0
        %v899 = vadd.f32 0.0, %v898
        %v900 = vpop.f32.mrf.mxu0
        %v901 = vadd.f32 0.0, %v900
        %902 = vmatprep.mubr.f32.mxu0 0.0
        %903 = vmatmul.mubr.f32.gmra.mxu0 %v821
        %v904 = vpop.f32.mrf.mxu0
        %v905 = vadd.f32 0.0, %v904
        %v906 = vpop.f32.mrf.mxu0
        %v907 = vadd.f32 0.0, %v906
        %908 = vmatprep.mubr.f32.mxu0 0.0
        %909 = vmatmul.mubr.f32.gmra.mxu0 %v824
        %v910 = vpop.f32.mrf.mxu0
        %v911 = vadd.f32 0.0, %v910
        %v912 = vpop.f32.mrf.mxu0
        %v913 = vadd.f32 0.0, %v912
        %914 = vdwg.mxu0
        %v915 = vadd.f32 %v667, %v893
        %v916 = vadd.f32 %v669, %v895
        %v917 = vadd.f32 %v673, %v899
        %v918 = vadd.f32 %v675, %v901
        %v919 = vadd.f32 %v679, %v905
        %v920 = vadd.f32 %v681, %v907
        %v921 = vadd.f32 %v685, %v911
        %v922 = vadd.f32 %v687, %v913
        %v923 = vld [vmem:[%s2] sm:$0xff]
        %v924 = vld [vmem:[%s2 + $0x8] sm:$0xff]
        %v925 = vld [vmem:[%s2 + $0x10] sm:$0xff]
        %v926 = vld [vmem:[%s2 + $0x18] sm:$0xff]
        %928 = vset.pattern.permute.xlu0 0
        %929 = vperm.xlu0 %928, %v923
        %v930 = vpop.permute.xlu0 %929
        %933 = vset.pattern.permute.xlu0 0
        %934 = vperm.xlu0 %933, %v924
        %v935 = vpop.permute.xlu0 %934
        %938 = vset.pattern.permute.xlu0 0
        %939 = vperm.xlu0 %938, %v925
        %v940 = vpop.permute.xlu0 %939
        %943 = vset.pattern.permute.xlu0 0
        %944 = vperm.xlu0 %943, %v926
        %v945 = vpop.permute.xlu0 %944
        %v947 = vadd.f32 %v915, %v930
        %v948 = vadd.f32 %v916, %v930
        %v949 = vadd.f32 %v917, %v935
        %v950 = vadd.f32 %v918, %v935
        %v951 = vadd.f32 %v919, %v940
        %v952 = vadd.f32 %v920, %v940
        %v953 = vadd.f32 %v921, %v945
        %v954 = vadd.f32 %v922, %v945
        %v955 = vmax.f32 %v947, 0.0
        %v956 = vmax.f32 %v948, 0.0
        %v957 = vmax.f32 %v949, 0.0
        %v958 = vmax.f32 %v950, 0.0
        %v959 = vmax.f32 %v951, 0.0
        %v960 = vmax.f32 %v952, 0.0
        %v961 = vmax.f32 %v953, 0.0
        %v962 = vmax.f32 %v954, 0.0
        %v963 = vmul.f32 %v956, %v270
        %v964 = vmul.f32 %v955, %v274
        %v965 = vmul.f32 %v956, %v272
        %v966 = vmul.f32 %v958, %v270
        %v967 = vmul.f32 %v957, %v274
        %v968 = vmul.f32 %v958, %v272
        %v969 = vmul.f32 %v960, %v270
        %v970 = vmul.f32 %v959, %v274
        %v971 = vmul.f32 %v960, %v272
        %v972 = vmul.f32 %v962, %v270
        %v973 = vmul.f32 %v961, %v274
        %v974 = vmul.f32 %v962, %v272
        %v975 = vmul.f32 %v956, %v292
        %v976 = vmul.f32 %v955, %v296
        %v977 = vmul.f32 %v956, %v294
        %v978 = vmul.f32 %v958, %v292
        %v979 = vmul.f32 %v957, %v296
        %v980 = vmul.f32 %v958, %v294
        %v981 = vmul.f32 %v960, %v292
        %v982 = vmul.f32 %v959, %v296
        %v983 = vmul.f32 %v960, %v294
        %v984 = vmul.f32 %v962, %v292
        %v985 = vmul.f32 %v961, %v296
        %v986 = vmul.f32 %v962, %v294
        %v987 = vmul.f32 %v956, %v314
        %v988 = vmul.f32 %v955, %v318
        %v989 = vmul.f32 %v956, %v316
        %v990 = vmul.f32 %v958, %v314
        %v991 = vmul.f32 %v957, %v318
        %v992 = vmul.f32 %v958, %v316
        %v993 = vmul.f32 %v960, %v314
        %v994 = vmul.f32 %v959, %v318
        %v995 = vmul.f32 %v960, %v316
        %v996 = vmul.f32 %v962, %v314
        %v997 = vmul.f32 %v961, %v318
        %v998 = vmul.f32 %v962, %v316
        %1011 = vrot.lane.b32.xlu0 %v975, 127
        %v1012 = vpop.permute.xlu0 %1011
        %1013 = vrot.lane.b32.xlu0 %v976, 127
        %v1014 = vpop.permute.xlu0 %1013
        %1015 = vrot.lane.b32.xlu0 %v977, 127
        %v1016 = vpop.permute.xlu0 %1015
        %1017 = vrot.lane.b32.xlu0 %v978, 127
        %v1018 = vpop.permute.xlu0 %1017
        %1019 = vrot.lane.b32.xlu0 %v979, 127
        %v1020 = vpop.permute.xlu0 %1019
        %1021 = vrot.lane.b32.xlu0 %v980, 127
        %v1022 = vpop.permute.xlu0 %1021
        %1023 = vrot.lane.b32.xlu0 %v981, 127
        %v1024 = vpop.permute.xlu0 %1023
        %1025 = vrot.lane.b32.xlu0 %v982, 127
        %v1026 = vpop.permute.xlu0 %1025
        %1027 = vrot.lane.b32.xlu0 %v983, 127
        %v1028 = vpop.permute.xlu0 %1027
        %1029 = vrot.lane.b32.xlu0 %v984, 127
        %v1030 = vpop.permute.xlu0 %1029
        %1031 = vrot.lane.b32.xlu0 %v985, 127
        %v1032 = vpop.permute.xlu0 %1031
        %1033 = vrot.lane.b32.xlu0 %v986, 127
        %v1034 = vpop.permute.xlu0 %1033
        %v1035 = vsel %vm334, %v1012, %v1014
        %v1036 = vsel %vm334, %v1014, %v1016
        %v1037 = vsel %vm334, %v1018, %v1020
        %v1038 = vsel %vm334, %v1020, %v1022
        %v1039 = vsel %vm334, %v1024, %v1026
        %v1040 = vsel %vm334, %v1026, %v1028
        %v1041 = vsel %vm334, %v1030, %v1032
        %v1042 = vsel %vm334, %v1032, %v1034
        %1055 = vrot.lane.b32.xlu0 %v987, 126
        %v1056 = vpop.permute.xlu0 %1055
        %1057 = vrot.lane.b32.xlu0 %v988, 126
        %v1058 = vpop.permute.xlu0 %1057
        %1059 = vrot.lane.b32.xlu0 %v989, 126
        %v1060 = vpop.permute.xlu0 %1059
        %1061 = vrot.lane.b32.xlu0 %v990, 126
        %v1062 = vpop.permute.xlu0 %1061
        %1063 = vrot.lane.b32.xlu0 %v991, 126
        %v1064 = vpop.permute.xlu0 %1063
        %1065 = vrot.lane.b32.xlu0 %v992, 126
        %v1066 = vpop.permute.xlu0 %1065
        %1067 = vrot.lane.b32.xlu0 %v993, 126
        %v1068 = vpop.permute.xlu0 %1067
        %1069 = vrot.lane.b32.xlu0 %v994, 126
        %v1070 = vpop.permute.xlu0 %1069
        %1071 = vrot.lane.b32.xlu0 %v995, 126
        %v1072 = vpop.permute.xlu0 %1071
        %1073 = vrot.lane.b32.xlu0 %v996, 126
        %v1074 = vpop.permute.xlu0 %1073
        %1075 = vrot.lane.b32.xlu0 %v997, 126
        %v1076 = vpop.permute.xlu0 %1075
        %1077 = vrot.lane.b32.xlu0 %v998, 126
        %v1078 = vpop.permute.xlu0 %1077
        %v1079 = vsel %vm346, %v1056, %v1058
        %v1080 = vsel %vm346, %v1058, %v1060
        %v1081 = vsel %vm346, %v1062, %v1064
        %v1082 = vsel %vm346, %v1064, %v1066
        %v1083 = vsel %vm346, %v1068, %v1070
        %v1084 = vsel %vm346, %v1070, %v1072
        %v1085 = vsel %vm346, %v1074, %v1076
        %v1086 = vsel %vm346, %v1076, %v1078
        %v1087 = vld [vmem:[%s3] sm:$0xff]
        %v1088 = vmul.f32 %v956, %v364
        %v1089 = vmul.f32 %v955, %v367
        %v1090 = vmul.f32 %v956, %v366
        %v1091 = vmul.f32 %v958, %v364
        %v1092 = vmul.f32 %v957, %v367
        %v1093 = vmul.f32 %v958, %v366
        %v1094 = vmul.f32 %v960, %v364
        %v1095 = vmul.f32 %v959, %v367
        %v1096 = vmul.f32 %v960, %v366
        %v1097 = vmul.f32 %v962, %v364
        %v1098 = vmul.f32 %v961, %v367
        %v1099 = vmul.f32 %v962, %v366
        %v1100 = vmul.f32 %v955, %v385
        %v1101 = vmul.f32 %v956, %v389
        %v1102 = vmul.f32 %v955, %v387
        %v1103 = vmul.f32 %v957, %v385
        %v1104 = vmul.f32 %v958, %v389
        %v1105 = vmul.f32 %v957, %v387
        %v1106 = vmul.f32 %v959, %v385
        %v1107 = vmul.f32 %v960, %v389
        %v1108 = vmul.f32 %v959, %v387
        %v1109 = vmul.f32 %v961, %v385
        %v1110 = vmul.f32 %v962, %v389
        %v1111 = vmul.f32 %v961, %v387
        %1120 = vrot.lane.b32.xlu0 %v955, 127
        %v1121 = vpop.permute.xlu0 %1120
        %1122 = vrot.lane.b32.xlu0 %v956, 127
        %v1123 = vpop.permute.xlu0 %1122
        %1124 = vrot.lane.b32.xlu0 %v957, 127
        %v1125 = vpop.permute.xlu0 %1124
        %1126 = vrot.lane.b32.xlu0 %v958, 127
        %v1127 = vpop.permute.xlu0 %1126
        %1128 = vrot.lane.b32.xlu0 %v959, 127
        %v1129 = vpop.permute.xlu0 %1128
        %1130 = vrot.lane.b32.xlu0 %v960, 127
        %v1131 = vpop.permute.xlu0 %1130
        %1132 = vrot.lane.b32.xlu0 %v961, 127
        %v1133 = vpop.permute.xlu0 %1132
        %1134 = vrot.lane.b32.xlu0 %v962, 127
        %v1135 = vpop.permute.xlu0 %1134
        %v1136 = vsel %vm334, %v1121, %v1123
        %v1137 = vsel %vm334, %v1125, %v1127
        %v1138 = vsel %vm334, %v1129, %v1131
        %v1139 = vsel %vm334, %v1133, %v1135
        %1152 = vrot.lane.b32.xlu0 %v1100, 126
        %v1153 = vpop.permute.xlu0 %1152
        %1154 = vrot.lane.b32.xlu0 %v1101, 126
        %v1155 = vpop.permute.xlu0 %1154
        %1156 = vrot.lane.b32.xlu0 %v1102, 126
        %v1157 = vpop.permute.xlu0 %1156
        %1158 = vrot.lane.b32.xlu0 %v1103, 126
        %v1159 = vpop.permute.xlu0 %1158
        %1160 = vrot.lane.b32.xlu0 %v1104, 126
        %v1161 = vpop.permute.xlu0 %1160
        %1162 = vrot.lane.b32.xlu0 %v1105, 126
        %v1163 = vpop.permute.xlu0 %1162
        %1164 = vrot.lane.b32.xlu0 %v1106, 126
        %v1165 = vpop.permute.xlu0 %1164
        %1166 = vrot.lane.b32.xlu0 %v1107, 126
        %v1167 = vpop.permute.xlu0 %1166
        %1168 = vrot.lane.b32.xlu0 %v1108, 126
        %v1169 = vpop.permute.xlu0 %1168
        %1170 = vrot.lane.b32.xlu0 %v1109, 126
        %v1171 = vpop.permute.xlu0 %1170
        %1172 = vrot.lane.b32.xlu0 %v1110, 126
        %v1173 = vpop.permute.xlu0 %1172
        %1174 = vrot.lane.b32.xlu0 %v1111, 126
        %v1175 = vpop.permute.xlu0 %1174
        %v1176 = vsel %vm346, %v1153, %v1155
        %v1177 = vsel %vm346, %v1155, %v1157
        %v1178 = vsel %vm346, %v1159, %v1161
        %v1179 = vsel %vm346, %v1161, %v1163
        %v1180 = vsel %vm346, %v1165, %v1167
        %v1181 = vsel %vm346, %v1167, %v1169
        %v1182 = vsel %vm346, %v1171, %v1173
        %v1183 = vsel %vm346, %v1173, %v1175
        %s1184 = scalar_lea.vmem %s3, 8
        %v1185 = vld [vmem:[%s1184] sm:$0xff]
        %1198 = vrot.lane.b32.xlu0 %v1088, 1
        %v1199 = vpop.permute.xlu0 %1198
        %1200 = vrot.lane.b32.xlu0 %v1089, 1
        %v1201 = vpop.permute.xlu0 %1200
        %1202 = vrot.lane.b32.xlu0 %v1090, 1
        %v1203 = vpop.permute.xlu0 %1202
        %1204 = vrot.lane.b32.xlu0 %v1091, 1
        %v1205 = vpop.permute.xlu0 %1204
        %1206 = vrot.lane.b32.xlu0 %v1092, 1
        %v1207 = vpop.permute.xlu0 %1206
        %1208 = vrot.lane.b32.xlu0 %v1093, 1
        %v1209 = vpop.permute.xlu0 %1208
        %1210 = vrot.lane.b32.xlu0 %v1094, 1
        %v1211 = vpop.permute.xlu0 %1210
        %1212 = vrot.lane.b32.xlu0 %v1095, 1
        %v1213 = vpop.permute.xlu0 %1212
        %1214 = vrot.lane.b32.xlu0 %v1096, 1
        %v1215 = vpop.permute.xlu0 %1214
        %1216 = vrot.lane.b32.xlu0 %v1097, 1
        %v1217 = vpop.permute.xlu0 %1216
        %1218 = vrot.lane.b32.xlu0 %v1098, 1
        %v1219 = vpop.permute.xlu0 %1218
        %1220 = vrot.lane.b32.xlu0 %v1099, 1
        %v1221 = vpop.permute.xlu0 %1220
        %1222 = vrot.lane.b32.xlu0 %v1121, 1
        %v1223 = vpop.permute.xlu0 %1222
        %1224 = vrot.lane.b32.xlu0 %v1136, 1
        %v1225 = vpop.permute.xlu0 %1224
        %1226 = vrot.lane.b32.xlu0 %v1123, 1
        %v1227 = vpop.permute.xlu0 %1226
        %1228 = vrot.lane.b32.xlu0 %v1125, 1
        %v1229 = vpop.permute.xlu0 %1228
        %1230 = vrot.lane.b32.xlu0 %v1137, 1
        %v1231 = vpop.permute.xlu0 %1230
        %1232 = vrot.lane.b32.xlu0 %v1127, 1
        %v1233 = vpop.permute.xlu0 %1232
        %1234 = vrot.lane.b32.xlu0 %v1129, 1
        %v1235 = vpop.permute.xlu0 %1234
        %1236 = vrot.lane.b32.xlu0 %v1138, 1
        %v1237 = vpop.permute.xlu0 %1236
        %1238 = vrot.lane.b32.xlu0 %v1131, 1
        %v1239 = vpop.permute.xlu0 %1238
        %1240 = vrot.lane.b32.xlu0 %v1133, 1
        %v1241 = vpop.permute.xlu0 %1240
        %1242 = vrot.lane.b32.xlu0 %v1139, 1
        %v1243 = vpop.permute.xlu0 %1242
        %1244 = vrot.lane.b32.xlu0 %v1135, 1
        %v1245 = vpop.permute.xlu0 %1244
        %1246 = vrot.lane.b32.xlu0 %v1153, 1
        %v1247 = vpop.permute.xlu0 %1246
        %1248 = vrot.lane.b32.xlu0 %v1176, 1
        %v1249 = vpop.permute.xlu0 %1248
        %1250 = vrot.lane.b32.xlu0 %v1177, 1
        %v1251 = vpop.permute.xlu0 %1250
        %1252 = vrot.lane.b32.xlu0 %v1159, 1
        %v1253 = vpop.permute.xlu0 %1252
        %1254 = vrot.lane.b32.xlu0 %v1178, 1
        %v1255 = vpop.permute.xlu0 %1254
        %1256 = vrot.lane.b32.xlu0 %v1179, 1
        %v1257 = vpop.permute.xlu0 %1256
        %1258 = vrot.lane.b32.xlu0 %v1165, 1
        %v1259 = vpop.permute.xlu0 %1258
        %1260 = vrot.lane.b32.xlu0 %v1180, 1
        %v1261 = vpop.permute.xlu0 %1260
        %1262 = vrot.lane.b32.xlu0 %v1181, 1
        %v1263 = vpop.permute.xlu0 %1262
        %1264 = vrot.lane.b32.xlu0 %v1171, 1
        %v1265 = vpop.permute.xlu0 %1264
        %1266 = vrot.lane.b32.xlu0 %v1182, 1
        %v1267 = vpop.permute.xlu0 %1266
        %1268 = vrot.lane.b32.xlu0 %v1183, 1
        %v1269 = vpop.permute.xlu0 %1268
        %v1270 = vsel %vm388, %v1199, %v1201
        %v1271 = vsel %vm388, %v1201, %v1203
        %v1272 = vsel %vm388, %v1205, %v1207
        %v1273 = vsel %vm388, %v1207, %v1209
        %v1274 = vsel %vm388, %v1211, %v1213
        %v1275 = vsel %vm388, %v1213, %v1215
        %v1276 = vsel %vm388, %v1217, %v1219
        %v1277 = vsel %vm388, %v1219, %v1221
        %v1278 = vsel %vm388, %v1223, %v1225
        %v1279 = vsel %vm388, %v1225, %v1227
        %v1280 = vsel %vm388, %v1229, %v1231
        %v1281 = vsel %vm388, %v1231, %v1233
        %v1282 = vsel %vm388, %v1235, %v1237
        %v1283 = vsel %vm388, %v1237, %v1239
        %v1284 = vsel %vm388, %v1241, %v1243
        %v1285 = vsel %vm388, %v1243, %v1245
        %v1286 = vsel %vm388, %v1247, %v1249
        %v1287 = vsel %vm388, %v1249, %v1251
        %v1288 = vsel %vm388, %v1253, %v1255
        %v1289 = vsel %vm388, %v1255, %v1257
        %v1290 = vsel %vm388, %v1259, %v1261
        %v1291 = vsel %vm388, %v1261, %v1263
        %v1292 = vsel %vm388, %v1265, %v1267
        %v1293 = vsel %vm388, %v1267, %v1269
        %vm1318 = vcmask 785408
        %v1320 = vsel %vm1318, %v1185, 0
        %1322 = vmatprep.subr.mxu0 0.0
        %1323 = vmatpush1.msra.mxu0 0.0
        %1324 = vmatprep.subr.mxu0 0.0
        %1325 = vmatpush1.msra.mxu0 0.0
        %1326 = vmatprep.subr.mxu0 0.0
        %1327 = vmatpush1.msra.mxu0 0.0
        %1328 = vmatprep.subr.mxu0 0.0
        %1329 = vmatpush1.msra.mxu0 0.0
        %1330 = vmatprep.subr.mxu0 %v1293
        %1331 = vmatpush1.msra.mxu0 %v1292
        %1332 = vmatprep.subr.mxu0 %v1291
        %1333 = vmatpush1.msra.mxu0 %v1290
        %1334 = vmatprep.subr.mxu0 %v1289
        %1335 = vmatpush1.msra.mxu0 %v1288
        %1336 = vmatprep.subr.mxu0 %v1287
        %1337 = vmatpush1.msra.mxu0 %v1286
        %1338 = vmatprep.subr.mxu0 %v1285
        %1339 = vmatpush1.msra.mxu0 %v1284
        %1340 = vmatprep.subr.mxu0 %v1283
        %1341 = vmatpush1.msra.mxu0 %v1282
        %1342 = vmatprep.subr.mxu0 %v1281
        %1343 = vmatpush1.msra.mxu0 %v1280
        %1344 = vmatprep.subr.mxu0 %v1279
        %1345 = vmatpush1.msra.mxu0 %v1278
        %1346 = vmatprep.subr.mxu0 %v1277
        %1347 = vmatpush1.msra.mxu0 %v1276
        %1348 = vmatprep.subr.mxu0 %v1275
        %1349 = vmatpush1.msra.mxu0 %v1274
        %1350 = vmatprep.subr.mxu0 %v1273
        %1351 = vmatpush1.msra.mxu0 %v1272
        %1352 = vmatprep.subr.mxu0 %v1271
        %1353 = vmatpush1.msra.mxu0 %v1270
        %1354 = vmatprep.subr.mxu0 0.0
        %1355 = vmatpush2.msra.mxu0 0.0
        %1356 = vmatprep.subr.mxu0 0.0
        %1357 = vmatpush2.msra.mxu0 0.0
        %1358 = vmatprep.subr.mxu0 0.0
        %1359 = vmatpush2.msra.mxu0 0.0
        %1360 = vmatprep.subr.mxu0 0.0
        %1361 = vmatpush2.msra.mxu0 0.0
        %1362 = vmatprep.subr.mxu0 0.0
        %1363 = vmatpush2.msra.mxu0 0.0
        %1364 = vmatprep.subr.mxu0 0.0
        %1365 = vmatpush2.msra.mxu0 0.0
        %1366 = vmatprep.subr.mxu0 0.0
        %1367 = vmatpush2.msra.mxu0 0.0
        %1368 = vmatprep.subr.mxu0 0.0
        %1369 = vmatpush2.msra.mxu0 0.0
        %1370 = vmatprep.subr.mxu0 0.0
        %1371 = vmatpush2.msra.mxu0 0.0
        %1372 = vmatprep.subr.mxu0 0.0
        %1373 = vmatpush2.msra.mxu0 0.0
        %1374 = vmatprep.subr.mxu0 0.0
        %1375 = vmatpush2.msra.mxu0 0.0
        %1376 = vmatprep.subr.mxu0 0.0
        %1377 = vmatpush2.msra.mxu0 0.0
        %1378 = vmatprep.subr.mxu0 0.0
        %1379 = vmatpush2.msra.mxu0 0.0
        %1380 = vmatprep.subr.mxu0 0.0
        %1381 = vmatpush2.msra.mxu0 0.0
        %1382 = vmatprep.subr.mxu0 0.0
        %1383 = vmatpush2.msra.mxu0 0.0
        %1384 = vmatprep.subr.mxu0 0.0
        %1385 = vmatpush2.msra.mxu0 0.0
        %1386 = vmatprep.mubr.f32.mxu0 0.0
        %1387 = vmatmul.mubr.f32.gmra.mxu0 %v1320
        %v1388 = vpop.f32.mrf.mxu0
        %v1389 = vadd.f32 0.0, %v1388
        %v1390 = vpop.f32.mrf.mxu0
        %v1391 = vadd.f32 0.0, %v1390
        %1392 = vdwg.mxu0
        %1405 = vrot.lane.b32.xlu0 %v963, 17
        %v1406 = vpop.permute.xlu0 %1405
        %1407 = vrot.lane.b32.xlu0 %v964, 17
        %v1408 = vpop.permute.xlu0 %1407
        %1409 = vrot.lane.b32.xlu0 %v965, 17
        %v1410 = vpop.permute.xlu0 %1409
        %1411 = vrot.lane.b32.xlu0 %v966, 17
        %v1412 = vpop.permute.xlu0 %1411
        %1413 = vrot.lane.b32.xlu0 %v967, 17
        %v1414 = vpop.permute.xlu0 %1413
        %1415 = vrot.lane.b32.xlu0 %v968, 17
        %v1416 = vpop.permute.xlu0 %1415
        %1417 = vrot.lane.b32.xlu0 %v969, 17
        %v1418 = vpop.permute.xlu0 %1417
        %1419 = vrot.lane.b32.xlu0 %v970, 17
        %v1420 = vpop.permute.xlu0 %1419
        %1421 = vrot.lane.b32.xlu0 %v971, 17
        %v1422 = vpop.permute.xlu0 %1421
        %1423 = vrot.lane.b32.xlu0 %v972, 17
        %v1424 = vpop.permute.xlu0 %1423
        %1425 = vrot.lane.b32.xlu0 %v973, 17
        %v1426 = vpop.permute.xlu0 %1425
        %1427 = vrot.lane.b32.xlu0 %v974, 17
        %v1428 = vpop.permute.xlu0 %1427
        %1429 = vrot.lane.b32.xlu0 %v1035, 17
        %v1430 = vpop.permute.xlu0 %1429
        %1431 = vrot.lane.b32.xlu0 %v1036, 17
        %v1432 = vpop.permute.xlu0 %1431
        %1433 = vrot.lane.b32.xlu0 %v1016, 17
        %v1434 = vpop.permute.xlu0 %1433
        %1435 = vrot.lane.b32.xlu0 %v1037, 17
        %v1436 = vpop.permute.xlu0 %1435
        %1437 = vrot.lane.b32.xlu0 %v1038, 17
        %v1438 = vpop.permute.xlu0 %1437
        %1439 = vrot.lane.b32.xlu0 %v1022, 17
        %v1440 = vpop.permute.xlu0 %1439
        %1441 = vrot.lane.b32.xlu0 %v1039, 17
        %v1442 = vpop.permute.xlu0 %1441
        %1443 = vrot.lane.b32.xlu0 %v1040, 17
        %v1444 = vpop.permute.xlu0 %1443
        %1445 = vrot.lane.b32.xlu0 %v1028, 17
        %v1446 = vpop.permute.xlu0 %1445
        %1447 = vrot.lane.b32.xlu0 %v1041, 17
        %v1448 = vpop.permute.xlu0 %1447
        %1449 = vrot.lane.b32.xlu0 %v1042, 17
        %v1450 = vpop.permute.xlu0 %1449
        %1451 = vrot.lane.b32.xlu0 %v1034, 17
        %v1452 = vpop.permute.xlu0 %1451
        %1453 = vrot.lane.b32.xlu0 %v1079, 17
        %v1454 = vpop.permute.xlu0 %1453
        %1455 = vrot.lane.b32.xlu0 %v1080, 17
        %v1456 = vpop.permute.xlu0 %1455
        %1457 = vrot.lane.b32.xlu0 %v1060, 17
        %v1458 = vpop.permute.xlu0 %1457
        %1459 = vrot.lane.b32.xlu0 %v1081, 17
        %v1460 = vpop.permute.xlu0 %1459
        %1461 = vrot.lane.b32.xlu0 %v1082, 17
        %v1462 = vpop.permute.xlu0 %1461
        %1463 = vrot.lane.b32.xlu0 %v1066, 17
        %v1464 = vpop.permute.xlu0 %1463
        %1465 = vrot.lane.b32.xlu0 %v1083, 17
        %v1466 = vpop.permute.xlu0 %1465
        %1467 = vrot.lane.b32.xlu0 %v1084, 17
        %v1468 = vpop.permute.xlu0 %1467
        %1469 = vrot.lane.b32.xlu0 %v1072, 17
        %v1470 = vpop.permute.xlu0 %1469
        %1471 = vrot.lane.b32.xlu0 %v1085, 17
        %v1472 = vpop.permute.xlu0 %1471
        %1473 = vrot.lane.b32.xlu0 %v1086, 17
        %v1474 = vpop.permute.xlu0 %1473
        %1475 = vrot.lane.b32.xlu0 %v1078, 17
        %v1476 = vpop.permute.xlu0 %1475
        %v1477 = vsel %vm575, %v1406, %v1408
        %v1478 = vsel %vm575, %v1408, %v1410
        %v1479 = vsel %vm575, %v1412, %v1414
        %v1480 = vsel %vm575, %v1414, %v1416
        %v1481 = vsel %vm575, %v1418, %v1420
        %v1482 = vsel %vm575, %v1420, %v1422
        %v1483 = vsel %vm575, %v1424, %v1426
        %v1484 = vsel %vm575, %v1426, %v1428
        %v1485 = vsel %vm575, %v1430, %v1432
        %v1486 = vsel %vm575, %v1432, %v1434
        %v1487 = vsel %vm575, %v1436, %v1438
        %v1488 = vsel %vm575, %v1438, %v1440
        %v1489 = vsel %vm575, %v1442, %v1444
        %v1490 = vsel %vm575, %v1444, %v1446
        %v1491 = vsel %vm575, %v1448, %v1450
        %v1492 = vsel %vm575, %v1450, %v1452
        %v1493 = vsel %vm575, %v1454, %v1456
        %v1494 = vsel %vm575, %v1456, %v1458
        %v1495 = vsel %vm575, %v1460, %v1462
        %v1496 = vsel %vm575, %v1462, %v1464
        %v1497 = vsel %vm575, %v1466, %v1468
        %v1498 = vsel %vm575, %v1468, %v1470
        %v1499 = vsel %vm575, %v1472, %v1474
        %v1500 = vsel %vm575, %v1474, %v1476
        %v1526 = vsel %vm1318, %v1087, 0
        %1528 = vmatprep.subr.mxu0 0.0
        %1529 = vmatpush1.msra.mxu0 0.0
        %1530 = vmatprep.subr.mxu0 0.0
        %1531 = vmatpush1.msra.mxu0 0.0
        %1532 = vmatprep.subr.mxu0 0.0
        %1533 = vmatpush1.msra.mxu0 0.0
        %1534 = vmatprep.subr.mxu0 0.0
        %1535 = vmatpush1.msra.mxu0 0.0
        %1536 = vmatprep.subr.mxu0 %v1500
        %1537 = vmatpush1.msra.mxu0 %v1499
        %1538 = vmatprep.subr.mxu0 %v1498
        %1539 = vmatpush1.msra.mxu0 %v1497
        %1540 = vmatprep.subr.mxu0 %v1496
        %1541 = vmatpush1.msra.mxu0 %v1495
        %1542 = vmatprep.subr.mxu0 %v1494
        %1543 = vmatpush1.msra.mxu0 %v1493
        %1544 = vmatprep.subr.mxu0 %v1492
        %1545 = vmatpush1.msra.mxu0 %v1491
        %1546 = vmatprep.subr.mxu0 %v1490
        %1547 = vmatpush1.msra.mxu0 %v1489
        %1548 = vmatprep.subr.mxu0 %v1488
        %1549 = vmatpush1.msra.mxu0 %v1487
        %1550 = vmatprep.subr.mxu0 %v1486
        %1551 = vmatpush1.msra.mxu0 %v1485
        %1552 = vmatprep.subr.mxu0 %v1484
        %1553 = vmatpush1.msra.mxu0 %v1483
        %1554 = vmatprep.subr.mxu0 %v1482
        %1555 = vmatpush1.msra.mxu0 %v1481
        %1556 = vmatprep.subr.mxu0 %v1480
        %1557 = vmatpush1.msra.mxu0 %v1479
        %1558 = vmatprep.subr.mxu0 %v1478
        %1559 = vmatpush1.msra.mxu0 %v1477
        %1560 = vmatprep.subr.mxu0 0.0
        %1561 = vmatpush2.msra.mxu0 0.0
        %1562 = vmatprep.subr.mxu0 0.0
        %1563 = vmatpush2.msra.mxu0 0.0
        %1564 = vmatprep.subr.mxu0 0.0
        %1565 = vmatpush2.msra.mxu0 0.0
        %1566 = vmatprep.subr.mxu0 0.0
        %1567 = vmatpush2.msra.mxu0 0.0
        %1568 = vmatprep.subr.mxu0 0.0
        %1569 = vmatpush2.msra.mxu0 0.0
        %1570 = vmatprep.subr.mxu0 0.0
        %1571 = vmatpush2.msra.mxu0 0.0
        %1572 = vmatprep.subr.mxu0 0.0
        %1573 = vmatpush2.msra.mxu0 0.0
        %1574 = vmatprep.subr.mxu0 0.0
        %1575 = vmatpush2.msra.mxu0 0.0
        %1576 = vmatprep.subr.mxu0 0.0
        %1577 = vmatpush2.msra.mxu0 0.0
        %1578 = vmatprep.subr.mxu0 0.0
        %1579 = vmatpush2.msra.mxu0 0.0
        %1580 = vmatprep.subr.mxu0 0.0
        %1581 = vmatpush2.msra.mxu0 0.0
        %1582 = vmatprep.subr.mxu0 0.0
        %1583 = vmatpush2.msra.mxu0 0.0
        %1584 = vmatprep.subr.mxu0 0.0
        %1585 = vmatpush2.msra.mxu0 0.0
        %1586 = vmatprep.subr.mxu0 0.0
        %1587 = vmatpush2.msra.mxu0 0.0
        %1588 = vmatprep.subr.mxu0 0.0
        %1589 = vmatpush2.msra.mxu0 0.0
        %1590 = vmatprep.subr.mxu0 0.0
        %1591 = vmatpush2.msra.mxu0 0.0
        %1592 = vmatprep.mubr.f32.mxu0 0.0
        %1593 = vmatmul.mubr.f32.gmra.mxu0 %v1526
        %v1594 = vpop.f32.mrf.mxu0
        %v1595 = vadd.f32 %v1389, %v1594
        %v1596 = vpop.f32.mrf.mxu0
        %v1597 = vadd.f32 %v1391, %v1596
        %1598 = vdwg.mxu0
        %v1599 = vmul.f32 %v955, %v700
        %v1600 = vmul.f32 %v956, %v704
        %v1601 = vmul.f32 %v955, %v702
        %v1602 = vmul.f32 %v957, %v700
        %v1603 = vmul.f32 %v958, %v704
        %v1604 = vmul.f32 %v957, %v702
        %v1605 = vmul.f32 %v959, %v700
        %v1606 = vmul.f32 %v960, %v704
        %v1607 = vmul.f32 %v959, %v702
        %v1608 = vmul.f32 %v961, %v700
        %v1609 = vmul.f32 %v962, %v704
        %v1610 = vmul.f32 %v961, %v702
        %v1611 = vmul.f32 %v955, %v722
        %v1612 = vmul.f32 %v956, %v726
        %v1613 = vmul.f32 %v955, %v724
        %v1614 = vmul.f32 %v957, %v722
        %v1615 = vmul.f32 %v958, %v726
        %v1616 = vmul.f32 %v957, %v724
        %v1617 = vmul.f32 %v959, %v722
        %v1618 = vmul.f32 %v960, %v726
        %v1619 = vmul.f32 %v959, %v724
        %v1620 = vmul.f32 %v961, %v722
        %v1621 = vmul.f32 %v962, %v726
        %v1622 = vmul.f32 %v961, %v724
        %v1623 = vmul.f32 %v955, %v744
        %v1624 = vmul.f32 %v956, %v747
        %v1625 = vmul.f32 %v955, %v746
        %v1626 = vmul.f32 %v957, %v744
        %v1627 = vmul.f32 %v958, %v747
        %v1628 = vmul.f32 %v957, %v746
        %v1629 = vmul.f32 %v959, %v744
        %v1630 = vmul.f32 %v960, %v747
        %v1631 = vmul.f32 %v959, %v746
        %v1632 = vmul.f32 %v961, %v744
        %v1633 = vmul.f32 %v962, %v747
        %v1634 = vmul.f32 %v961, %v746
        %1647 = vrot.lane.b32.xlu0 %v1611, 127
        %v1648 = vpop.permute.xlu0 %1647
        %1649 = vrot.lane.b32.xlu0 %v1612, 127
        %v1650 = vpop.permute.xlu0 %1649
        %1651 = vrot.lane.b32.xlu0 %v1613, 127
        %v1652 = vpop.permute.xlu0 %1651
        %1653 = vrot.lane.b32.xlu0 %v1614, 127
        %v1654 = vpop.permute.xlu0 %1653
        %1655 = vrot.lane.b32.xlu0 %v1615, 127
        %v1656 = vpop.permute.xlu0 %1655
        %1657 = vrot.lane.b32.xlu0 %v1616, 127
        %v1658 = vpop.permute.xlu0 %1657
        %1659 = vrot.lane.b32.xlu0 %v1617, 127
        %v1660 = vpop.permute.xlu0 %1659
        %1661 = vrot.lane.b32.xlu0 %v1618, 127
        %v1662 = vpop.permute.xlu0 %1661
        %1663 = vrot.lane.b32.xlu0 %v1619, 127
        %v1664 = vpop.permute.xlu0 %1663
        %1665 = vrot.lane.b32.xlu0 %v1620, 127
        %v1666 = vpop.permute.xlu0 %1665
        %1667 = vrot.lane.b32.xlu0 %v1621, 127
        %v1668 = vpop.permute.xlu0 %1667
        %1669 = vrot.lane.b32.xlu0 %v1622, 127
        %v1670 = vpop.permute.xlu0 %1669
        %v1671 = vsel %vm334, %v1648, %v1650
        %v1672 = vsel %vm334, %v1650, %v1652
        %v1673 = vsel %vm334, %v1654, %v1656
        %v1674 = vsel %vm334, %v1656, %v1658
        %v1675 = vsel %vm334, %v1660, %v1662
        %v1676 = vsel %vm334, %v1662, %v1664
        %v1677 = vsel %vm334, %v1666, %v1668
        %v1678 = vsel %vm334, %v1668, %v1670
        %1691 = vrot.lane.b32.xlu0 %v1623, 126
        %v1692 = vpop.permute.xlu0 %1691
        %1693 = vrot.lane.b32.xlu0 %v1624, 126
        %v1694 = vpop.permute.xlu0 %1693
        %1695 = vrot.lane.b32.xlu0 %v1625, 126
        %v1696 = vpop.permute.xlu0 %1695
        %1697 = vrot.lane.b32.xlu0 %v1626, 126
        %v1698 = vpop.permute.xlu0 %1697
        %1699 = vrot.lane.b32.xlu0 %v1627, 126
        %v1700 = vpop.permute.xlu0 %1699
        %1701 = vrot.lane.b32.xlu0 %v1628, 126
        %v1702 = vpop.permute.xlu0 %1701
        %1703 = vrot.lane.b32.xlu0 %v1629, 126
        %v1704 = vpop.permute.xlu0 %1703
        %1705 = vrot.lane.b32.xlu0 %v1630, 126
        %v1706 = vpop.permute.xlu0 %1705
        %1707 = vrot.lane.b32.xlu0 %v1631, 126
        %v1708 = vpop.permute.xlu0 %1707
        %1709 = vrot.lane.b32.xlu0 %v1632, 126
        %v1710 = vpop.permute.xlu0 %1709
        %1711 = vrot.lane.b32.xlu0 %v1633, 126
        %v1712 = vpop.permute.xlu0 %1711
        %1713 = vrot.lane.b32.xlu0 %v1634, 126
        %v1714 = vpop.permute.xlu0 %1713
        %v1715 = vsel %vm346, %v1692, %v1694
        %v1716 = vsel %vm346, %v1694, %v1696
        %v1717 = vsel %vm346, %v1698, %v1700
        %v1718 = vsel %vm346, %v1700, %v1702
        %v1719 = vsel %vm346, %v1704, %v1706
        %v1720 = vsel %vm346, %v1706, %v1708
        %v1721 = vsel %vm346, %v1710, %v1712
        %v1722 = vsel %vm346, %v1712, %v1714
        %s1723 = scalar_lea.vmem %s3, 16
        %v1724 = vld [vmem:[%s1723] sm:$0xff]
        %1737 = vrot.lane.b32.xlu0 %v1599, 113
        %v1738 = vpop.permute.xlu0 %1737
        %1739 = vrot.lane.b32.xlu0 %v1600, 113
        %v1740 = vpop.permute.xlu0 %1739
        %1741 = vrot.lane.b32.xlu0 %v1601, 113
        %v1742 = vpop.permute.xlu0 %1741
        %1743 = vrot.lane.b32.xlu0 %v1602, 113
        %v1744 = vpop.permute.xlu0 %1743
        %1745 = vrot.lane.b32.xlu0 %v1603, 113
        %v1746 = vpop.permute.xlu0 %1745
        %1747 = vrot.lane.b32.xlu0 %v1604, 113
        %v1748 = vpop.permute.xlu0 %1747
        %1749 = vrot.lane.b32.xlu0 %v1605, 113
        %v1750 = vpop.permute.xlu0 %1749
        %1751 = vrot.lane.b32.xlu0 %v1606, 113
        %v1752 = vpop.permute.xlu0 %1751
        %1753 = vrot.lane.b32.xlu0 %v1607, 113
        %v1754 = vpop.permute.xlu0 %1753
        %1755 = vrot.lane.b32.xlu0 %v1608, 113
        %v1756 = vpop.permute.xlu0 %1755
        %1757 = vrot.lane.b32.xlu0 %v1609, 113
        %v1758 = vpop.permute.xlu0 %1757
        %1759 = vrot.lane.b32.xlu0 %v1610, 113
        %v1760 = vpop.permute.xlu0 %1759
        %1761 = vrot.lane.b32.xlu0 %v1671, 113
        %v1762 = vpop.permute.xlu0 %1761
        %1763 = vrot.lane.b32.xlu0 %v1672, 113
        %v1764 = vpop.permute.xlu0 %1763
        %1765 = vrot.lane.b32.xlu0 %v1652, 113
        %v1766 = vpop.permute.xlu0 %1765
        %1767 = vrot.lane.b32.xlu0 %v1673, 113
        %v1768 = vpop.permute.xlu0 %1767
        %1769 = vrot.lane.b32.xlu0 %v1674, 113
        %v1770 = vpop.permute.xlu0 %1769
        %1771 = vrot.lane.b32.xlu0 %v1658, 113
        %v1772 = vpop.permute.xlu0 %1771
        %1773 = vrot.lane.b32.xlu0 %v1675, 113
        %v1774 = vpop.permute.xlu0 %1773
        %1775 = vrot.lane.b32.xlu0 %v1676, 113
        %v1776 = vpop.permute.xlu0 %1775
        %1777 = vrot.lane.b32.xlu0 %v1664, 113
        %v1778 = vpop.permute.xlu0 %1777
        %1779 = vrot.lane.b32.xlu0 %v1677, 113
        %v1780 = vpop.permute.xlu0 %1779
        %1781 = vrot.lane.b32.xlu0 %v1678, 113
        %v1782 = vpop.permute.xlu0 %1781
        %1783 = vrot.lane.b32.xlu0 %v1670, 113
        %v1784 = vpop.permute.xlu0 %1783
        %1785 = vrot.lane.b32.xlu0 %v1715, 113
        %v1786 = vpop.permute.xlu0 %1785
        %1787 = vrot.lane.b32.xlu0 %v1716, 113
        %v1788 = vpop.permute.xlu0 %1787
        %1789 = vrot.lane.b32.xlu0 %v1696, 113
        %v1790 = vpop.permute.xlu0 %1789
        %1791 = vrot.lane.b32.xlu0 %v1717, 113
        %v1792 = vpop.permute.xlu0 %1791
        %1793 = vrot.lane.b32.xlu0 %v1718, 113
        %v1794 = vpop.permute.xlu0 %1793
        %1795 = vrot.lane.b32.xlu0 %v1702, 113
        %v1796 = vpop.permute.xlu0 %1795
        %1797 = vrot.lane.b32.xlu0 %v1719, 113
        %v1798 = vpop.permute.xlu0 %1797
        %1799 = vrot.lane.b32.xlu0 %v1720, 113
        %v1800 = vpop.permute.xlu0 %1799
        %1801 = vrot.lane.b32.xlu0 %v1708, 113
        %v1802 = vpop.permute.xlu0 %1801
        %1803 = vrot.lane.b32.xlu0 %v1721, 113
        %v1804 = vpop.permute.xlu0 %1803
        %1805 = vrot.lane.b32.xlu0 %v1722, 113
        %v1806 = vpop.permute.xlu0 %1805
        %1807 = vrot.lane.b32.xlu0 %v1714, 113
        %v1808 = vpop.permute.xlu0 %1807
        %v1809 = vsel %vm317, %v1738, %v1740
        %v1810 = vsel %vm317, %v1740, %v1742
        %v1811 = vsel %vm317, %v1744, %v1746
        %v1812 = vsel %vm317, %v1746, %v1748
        %v1813 = vsel %vm317, %v1750, %v1752
        %v1814 = vsel %vm317, %v1752, %v1754
        %v1815 = vsel %vm317, %v1756, %v1758
        %v1816 = vsel %vm317, %v1758, %v1760
        %v1817 = vsel %vm317, %v1762, %v1764
        %v1818 = vsel %vm317, %v1764, %v1766
        %v1819 = vsel %vm317, %v1768, %v1770
        %v1820 = vsel %vm317, %v1770, %v1772
        %v1821 = vsel %vm317, %v1774, %v1776
        %v1822 = vsel %vm317, %v1776, %v1778
        %v1823 = vsel %vm317, %v1780, %v1782
        %v1824 = vsel %vm317, %v1782, %v1784
        %v1825 = vsel %vm317, %v1786, %v1788
        %v1826 = vsel %vm317, %v1788, %v1790
        %v1827 = vsel %vm317, %v1792, %v1794
        %v1828 = vsel %vm317, %v1794, %v1796
        %v1829 = vsel %vm317, %v1798, %v1800
        %v1830 = vsel %vm317, %v1800, %v1802
        %v1831 = vsel %vm317, %v1804, %v1806
        %v1832 = vsel %vm317, %v1806, %v1808
        %v1858 = vsel %vm1318, %v1724, 0
        %1860 = vmatprep.subr.mxu0 0.0
        %1861 = vmatpush1.msra.mxu0 0.0
        %1862 = vmatprep.subr.mxu0 0.0
        %1863 = vmatpush1.msra.mxu0 0.0
        %1864 = vmatprep.subr.mxu0 0.0
        %1865 = vmatpush1.msra.mxu0 0.0
        %1866 = vmatprep.subr.mxu0 0.0
        %1867 = vmatpush1.msra.mxu0 0.0
        %1868 = vmatprep.subr.mxu0 %v1832
        %1869 = vmatpush1.msra.mxu0 %v1831
        %1870 = vmatprep.subr.mxu0 %v1830
        %1871 = vmatpush1.msra.mxu0 %v1829
        %1872 = vmatprep.subr.mxu0 %v1828
        %1873 = vmatpush1.msra.mxu0 %v1827
        %1874 = vmatprep.subr.mxu0 %v1826
        %1875 = vmatpush1.msra.mxu0 %v1825
        %1876 = vmatprep.subr.mxu0 %v1824
        %1877 = vmatpush1.msra.mxu0 %v1823
        %1878 = vmatprep.subr.mxu0 %v1822
        %1879 = vmatpush1.msra.mxu0 %v1821
        %1880 = vmatprep.subr.mxu0 %v1820
        %1881 = vmatpush1.msra.mxu0 %v1819
        %1882 = vmatprep.subr.mxu0 %v1818
        %1883 = vmatpush1.msra.mxu0 %v1817
        %1884 = vmatprep.subr.mxu0 %v1816
        %1885 = vmatpush1.msra.mxu0 %v1815
        %1886 = vmatprep.subr.mxu0 %v1814
        %1887 = vmatpush1.msra.mxu0 %v1813
        %1888 = vmatprep.subr.mxu0 %v1812
        %1889 = vmatpush1.msra.mxu0 %v1811
        %1890 = vmatprep.subr.mxu0 %v1810
        %1891 = vmatpush1.msra.mxu0 %v1809
        %1892 = vmatprep.subr.mxu0 0.0
        %1893 = vmatpush2.msra.mxu0 0.0
        %1894 = vmatprep.subr.mxu0 0.0
        %1895 = vmatpush2.msra.mxu0 0.0
        %1896 = vmatprep.subr.mxu0 0.0
        %1897 = vmatpush2.msra.mxu0 0.0
        %1898 = vmatprep.subr.mxu0 0.0
        %1899 = vmatpush2.msra.mxu0 0.0
        %1900 = vmatprep.subr.mxu0 0.0
        %1901 = vmatpush2.msra.mxu0 0.0
        %1902 = vmatprep.subr.mxu0 0.0
        %1903 = vmatpush2.msra.mxu0 0.0
        %1904 = vmatprep.subr.mxu0 0.0
        %1905 = vmatpush2.msra.mxu0 0.0
        %1906 = vmatprep.subr.mxu0 0.0
        %1907 = vmatpush2.msra.mxu0 0.0
        %1908 = vmatprep.subr.mxu0 0.0
        %1909 = vmatpush2.msra.mxu0 0.0
        %1910 = vmatprep.subr.mxu0 0.0
        %1911 = vmatpush2.msra.mxu0 0.0
        %1912 = vmatprep.subr.mxu0 0.0
        %1913 = vmatpush2.msra.mxu0 0.0
        %1914 = vmatprep.subr.mxu0 0.0
        %1915 = vmatpush2.msra.mxu0 0.0
        %1916 = vmatprep.subr.mxu0 0.0
        %1917 = vmatpush2.msra.mxu0 0.0
        %1918 = vmatprep.subr.mxu0 0.0
        %1919 = vmatpush2.msra.mxu0 0.0
        %1920 = vmatprep.subr.mxu0 0.0
        %1921 = vmatpush2.msra.mxu0 0.0
        %1922 = vmatprep.subr.mxu0 0.0
        %1923 = vmatpush2.msra.mxu0 0.0
        %1924 = vmatprep.mubr.f32.mxu0 0.0
        %1925 = vmatmul.mubr.f32.gmra.mxu0 %v1858
        %v1926 = vpop.f32.mrf.mxu0
        %v1927 = vadd.f32 0.0, %v1926
        %v1928 = vpop.f32.mrf.mxu0
        %v1929 = vadd.f32 0.0, %v1928
        %1930 = vdwg.mxu0
        %v1931 = vadd.f32 %v1595, %v1927
        %v1932 = vadd.f32 %v1597, %v1929
        %v1933 = vld [vmem:[%s4] sm:$0xff]
        %1935 = vset.pattern.permute.xlu0 0
        %1936 = vperm.xlu0 %1935, %v1933
        %v1937 = vpop.permute.xlu0 %1936
        %v1939 = vadd.f32 %v1931, %v1937
        %v1940 = vadd.f32 %v1932, %v1937
        %1941 = vst [vmem:[%s245] sm:$0xff] %v1939
        %1942 = vst [vmem:[%s245 + $0x8] sm:$0xff] %v1940
        %s1943 = sand.u32 %s159, 1
        %s1944 = scalar_lea.sflag [#allocation3], %s1943
        %s1945 = sand.u32 %s159, 1
        %s1946 = smul.addr %s1945, 16
        %s1947 = scalar_lea.vmem [#allocation2], %s1946
        // Predicated region
        $region45: #{tpu_custom_call.1} parent=43 // pred_check
          %p1948 = pneg %p169
        $region46: #{tpu_custom_call.1} parent=43 // pred_check_branch
          %1950 = sbr.rel (%p1948) target = $region48
        $region47: #{tpu_custom_call.1} parent=43 // pred_region
          %s1951 = smul.u32 2, %s20
          %s1953 = ssub.s32 256, 256
          %1954 = vsyncadd %s1944, %s1953
          %s1955 = smul.addr %s1951, 128
          %s1956 = scalar_lea.hbm %s6, %s1955
          %s1958 = sshll.u32 %s1947, 4
          %s1959 = int_to_ptr.vmem [resolvable:$true] %s1958
          %1961 = dma.vmem_to_hbm [thread:$0]  %s1959, 256, %s1956, %s1944
        $region48: #{tpu_custom_call.1} parent=43 // pred_fallthru
          _
      $region44: #{tpu_custom_call.1} parent=5 // pred_fallthru
        _
      %p1962 = scmp.le.s32.totalorder 2, %s15
      // Predicated region
      $region49: #{tpu_custom_call.1} parent=5 // pred_check
        %p1963 = pneg %p1962
      $region50: #{tpu_custom_call.1} parent=5 // pred_check_branch
        %1965 = sbr.rel (%p1963) target = $region52
      $region51: #{tpu_custom_call.1} parent=5 // pred_region
        %s1966 = ssub.s32 %s15, 2
        // Predicated region
        $region53: #{tpu_custom_call.1} parent=51 // pred_check
          %p1967 = pneg %p175
        $region54: #{tpu_custom_call.1} parent=51 // pred_check_branch
          %1969 = sbr.rel (%p1967) target = $region56
        $region55: #{tpu_custom_call.1} parent=51 // pred_region
          %s1970 = sand.u32 %s160, 1
          %s1971 = scalar_lea.sflag [#allocation3], %s1970
          %s1972 = sand.u32 %s160, 1
          %s1973 = smul.addr %s1972, 16
          %s1974 = scalar_lea.vmem [#allocation2], %s1973
          %1975 = dma.done %s1971, 256
        $region56: #{tpu_custom_call.1} parent=51 // pred_fallthru
          _
      $region52: #{tpu_custom_call.1} parent=5 // pred_fallthru
        _
    $region6: #{tpu_custom_call.1} parent=1 // loop_footer
      %s19 = sadd.s32 1, %s15
    $region7: #{tpu_custom_call.1} parent=1 // loop_footer_branch
      %14 = sbr.rel target = $region3
    $region8: #{tpu_custom_call.1} parent=1 // loop_exit
      _
    %1976 = vsyncpa [#allocation3], 1
    %s1977 = scalar_lea.sflag [#allocation3], 1
    %1978 = vsyncpa %s1977, 1

</llo_original>
